<compile_context>
chip_gen: v7x
topology: tpu7x:2x2x1
jax: 0.10.0
libtpu: 0.0.40
codegen_flags: <defaults>
</compile_context>

<pallas_src>
import jax
import jax.numpy as jnp
from jax.experimental import pallas as pl
from jax.experimental.pallas import tpu as pltpu


def _fcn_kernel(x_ref, w1_ref, b1_ref, w2_ref, b2_ref, o_ref):
    """Fused FCN forward for one batch element.

    x_ref  : (H, W, Cin)      NHWC input tile (unpadded, f32)
    w1_ref : (9*Cin, Ch)      3x3 conv weights, rows ordered (ky, kx, c), bf16
    b1_ref : (1, Ch)          3x3 conv bias, f32
    w2_ref : (K, Ch)          1x1 conv weights (classifier head), bf16
    b2_ref : (K, 1)           1x1 conv bias, f32
    o_ref  : (K, H*W)         per-class logits, lane-dense NCHW element order
    """
    H, W, Cin = x_ref.shape

    # ---- in-kernel zero padding (avoids a jnp.pad HBM pass in the wrapper) --
    x = x_ref[...]                                       # (H, W, Cin) f32
    zrow = jnp.zeros((1, W, Cin), x.dtype)
    xp = jnp.concatenate([zrow, x, zrow], axis=0)        # (H+2, W, Cin)
    zcol = jnp.zeros((H + 2, 1, Cin), x.dtype)
    xp = jnp.concatenate([zcol, xp, zcol], axis=1)       # (H+2, W+2, Cin)

    # ---- im2col-lite: one (H*W, 9*Cin) slab, single deep MXU matmul --------
    patches = [xp[ky:ky + H, kx:kx + W, :]
               for ky in range(3) for kx in range(3)]    # each (H, W, Cin)
    slab = jnp.concatenate(patches, axis=-1)             # (H, W, 9*Cin)
    slab = slab.reshape(H * W, 9 * Cin).astype(jnp.bfloat16)

    acc = jnp.dot(slab, w1_ref[...],
                  preferred_element_type=jnp.float32)    # (H*W, Ch) f32
    hidden = jnp.maximum(acc + b1_ref[...], 0.0).astype(jnp.bfloat16)

    # ---- 1x1 classifier head, produced directly as (K, H*W) so the store is
    #      lane-dense (H*W on the 128-lane axis) and already NCHW-ordered. ----
    out_t = jax.lax.dot_general(
        w2_ref[...], hidden,
        dimension_numbers=(((1,), (1,)), ((), ())),      # (K,Ch) . (H*W,Ch)^T
        preferred_element_type=jnp.float32)              # (K, H*W)
    o_ref[...] = (out_t + b2_ref[...]).astype(o_ref.dtype)


def lcfcn_bo_plants_forward(x_nchw, w1, b1, w2, b2):
    """Forward pass.  x_nchw: (N, Cin, H, W) f32 -> (N, K, H, W) f32 logits."""
    N, Cin, H, W = x_nchw.shape
    Ch = w1.shape[3]
    K = w2.shape[1]
    HW = H * W

    # Single NCHW -> NHWC transpose (channels on lanes inside the kernel);
    # spatial padding happens in-kernel, output needs only a reshape.
    x_nhwc = jnp.transpose(x_nchw, (0, 2, 3, 1))

    # Weights reshaped / transposed once and cast to bf16 (MXU-native).
    w1f = w1.reshape(9 * Cin, Ch).astype(jnp.bfloat16)        # (9*Cin, Ch)
    w2t = jnp.transpose(w2, (1, 0)).astype(jnp.bfloat16)      # (K, Ch)
    b1r = b1.reshape(1, Ch).astype(jnp.float32)
    b2r = b2.reshape(K, 1).astype(jnp.float32)

    out = pl.pallas_call(
        _fcn_kernel,
        out_shape=jax.ShapeDtypeStruct((N, K, HW), jnp.float32),
        grid_spec=pltpu.PrefetchScalarGridSpec(
            num_scalar_prefetch=0,
            grid=(N,),
            in_specs=[
                pl.BlockSpec((pl.Squeezed(), H, W, Cin),
                             lambda n: (n, 0, 0, 0)),
                pl.BlockSpec((9 * Cin, Ch), lambda n: (0, 0)),
                pl.BlockSpec((1, Ch), lambda n: (0, 0)),
                pl.BlockSpec((K, Ch), lambda n: (0, 0)),
                pl.BlockSpec((K, 1), lambda n: (0, 0)),
            ],
            out_specs=pl.BlockSpec((pl.Squeezed(), K, HW),
                                   lambda n: (n, 0, 0)),
        ),
        compiler_params=pltpu.CompilerParams(
            dimension_semantics=("parallel",),
            vmem_limit_bytes=32 * 1024 * 1024),
    )(x_nhwc, w1f, b1r, w2t, b2r)

    # (N, K, H*W) -> (N, K, H, W): pure reshape (already NCHW element order).
    return out.reshape(N, K, H, W)


if __name__ == "__main__":
    # Small shapes consistent with the module's forward: NCHW RGB image batch.
    N, Cin, H, W = 2, 3, 16, 16
    HIDDEN = 32        # hidden feature width of the synthetic FCN
    N_CLASSES = 4      # per-pixel class logits (model.n_classes)

    key = jax.random.PRNGKey(0)
    k_x, k_w1, k_b1, k_w2, k_b2 = jax.random.split(key, 5)

    x = jax.random.normal(k_x, (N, Cin, H, W), dtype=jnp.float32)
    w1 = jax.random.normal(k_w1, (3, 3, Cin, HIDDEN), dtype=jnp.float32) * 0.1
    b1 = jax.random.normal(k_b1, (HIDDEN,), dtype=jnp.float32) * 0.01
    w2 = jax.random.normal(k_w2, (HIDDEN, N_CLASSES), dtype=jnp.float32) * 0.1
    b2 = jax.random.normal(k_b2, (N_CLASSES,), dtype=jnp.float32) * 0.01

    logits = lcfcn_bo_plants_forward(x, w1, b1, w2, b2)
    logits = jax.block_until_ready(logits)

    assert logits.shape == (N, N_CLASSES, H, W), logits.shape
    assert logits.dtype == jnp.float32

    # Plain-JAX reference with the same bf16 rounding points as the kernel.
    bf = jnp.bfloat16
    xr = x.astype(bf).astype(jnp.float32)
    w1r = w1.astype(bf).astype(jnp.float32)
    w2r = w2.astype(bf).astype(jnp.float32)
    ref = jax.lax.conv_general_dilated(
        xr, jnp.transpose(w1r, (3, 2, 0, 1)),               # OIHW
        window_strides=(1, 1), padding="SAME",
        dimension_numbers=("NCHW", "OIHW", "NCHW"))
    ref = jnp.maximum(ref + b1[None, :, None, None], 0.0)
    ref = ref.astype(bf).astype(jnp.float32)
    ref = jax.lax.conv_general_dilated(
        ref, jnp.transpose(w2r, (1, 0))[:, :, None, None],  # OIHW 1x1
        window_strides=(1, 1), padding="VALID",
        dimension_numbers=("NCHW", "OIHW", "NCHW"))
    ref = ref + b2[None, :, None, None]

    assert jnp.allclose(logits, ref, atol=2e-2, rtol=2e-2)
    print("KERNEL_OK")
</pallas_src>

<mosaic_0001>
module attributes {stable_mosaic.version = 11 : i64} {
  func.func @_fcn_kernel(%arg0: i32, %arg1: memref<1x16x16x3xf32, #tpu.memory_space<vmem>>, %arg2: memref<27x32xbf16, #tpu.memory_space<vmem>>, %arg3: memref<1x32xf32, #tpu.memory_space<vmem>>, %arg4: memref<4x32xbf16, #tpu.memory_space<vmem>>, %arg5: memref<4x1xf32, #tpu.memory_space<vmem>>, %arg6: memref<1x4x256xf32, #tpu.memory_space<vmem>>) attributes {dimension_semantics = [#tpu.dimension_semantics<parallel>], iteration_bounds = array<i64: 2>, scalar_prefetch = 0 : i64, scratch_operands = 0 : i64, tpu.core_type = #tpu.core_type<tc>, window_params = [{transform_indices = @transform_0, window_bounds = array<i64: 1, 16, 16, 3>}, {pipeline_mode = #tpu.pipeline_mode<synchronous>, transform_indices = @transform_1, window_bounds = array<i64: 27, 32>}, {pipeline_mode = #tpu.pipeline_mode<synchronous>, transform_indices = @transform_2, window_bounds = array<i64: 1, 32>}, {pipeline_mode = #tpu.pipeline_mode<synchronous>, transform_indices = @transform_3, window_bounds = array<i64: 4, 32>}, {pipeline_mode = #tpu.pipeline_mode<synchronous>, transform_indices = @transform_4, window_bounds = array<i64: 4, 1>}, {transform_indices = @transform_5, window_bounds = array<i64: 1, 4, 256>}]} {
    %c0 = arith.constant 0 : index
    %c0_0 = arith.constant 0 : index
    %c0_1 = arith.constant 0 : index
    %c0_2 = arith.constant 0 : index
    %0 = vector.load %arg1[%c0, %c0_0, %c0_1, %c0_2] : memref<1x16x16x3xf32, #tpu.memory_space<vmem>>, vector<1x16x16x3xf32>
    %1 = vector.shape_cast %0 : vector<1x16x16x3xf32> to vector<16x16x3xf32>
    %cst = arith.constant 0.000000e+00 : f32
    %2 = vector.broadcast %cst : f32 to vector<1x16x3xf32>
    %3 = tpu.concatenate %2, %1, %2 in 0 : vector<1x16x3xf32>, vector<16x16x3xf32>, vector<1x16x3xf32> -> vector<18x16x3xf32>
    %cst_3 = arith.constant 0.000000e+00 : f32
    %4 = vector.broadcast %cst_3 : f32 to vector<18x1x3xf32>
    %5 = tpu.concatenate %4, %3, %4 in 1 : vector<18x1x3xf32>, vector<18x16x3xf32>, vector<18x1x3xf32> -> vector<18x18x3xf32>
    %6 = vector.extract_strided_slice %5 {offsets = [0, 0, 0], sizes = [16, 16, 3], strides = [1, 1, 1]} : vector<18x18x3xf32> to vector<16x16x3xf32>
    %7 = vector.extract_strided_slice %5 {offsets = [0, 1, 0], sizes = [16, 16, 3], strides = [1, 1, 1]} : vector<18x18x3xf32> to vector<16x16x3xf32>
    %8 = vector.extract_strided_slice %5 {offsets = [0, 2, 0], sizes = [16, 16, 3], strides = [1, 1, 1]} : vector<18x18x3xf32> to vector<16x16x3xf32>
    %9 = vector.extract_strided_slice %5 {offsets = [1, 0, 0], sizes = [16, 16, 3], strides = [1, 1, 1]} : vector<18x18x3xf32> to vector<16x16x3xf32>
    %10 = vector.extract_strided_slice %5 {offsets = [1, 1, 0], sizes = [16, 16, 3], strides = [1, 1, 1]} : vector<18x18x3xf32> to vector<16x16x3xf32>
    %11 = vector.extract_strided_slice %5 {offsets = [1, 2, 0], sizes = [16, 16, 3], strides = [1, 1, 1]} : vector<18x18x3xf32> to vector<16x16x3xf32>
    %12 = vector.extract_strided_slice %5 {offsets = [2, 0, 0], sizes = [16, 16, 3], strides = [1, 1, 1]} : vector<18x18x3xf32> to vector<16x16x3xf32>
    %13 = vector.extract_strided_slice %5 {offsets = [2, 1, 0], sizes = [16, 16, 3], strides = [1, 1, 1]} : vector<18x18x3xf32> to vector<16x16x3xf32>
    %14 = vector.extract_strided_slice %5 {offsets = [2, 2, 0], sizes = [16, 16, 3], strides = [1, 1, 1]} : vector<18x18x3xf32> to vector<16x16x3xf32>
    %15 = tpu.concatenate %6, %7, %8, %9, %10, %11, %12, %13, %14 in 2 : vector<16x16x3xf32>, vector<16x16x3xf32>, vector<16x16x3xf32>, vector<16x16x3xf32>, vector<16x16x3xf32>, vector<16x16x3xf32>, vector<16x16x3xf32>, vector<16x16x3xf32>, vector<16x16x3xf32> -> vector<16x16x27xf32>
    %16 = vector.shape_cast %15 : vector<16x16x27xf32> to vector<256x27xf32>
    %17 = arith.truncf %16 : vector<256x27xf32> to vector<256x27xbf16>
    %c0_4 = arith.constant 0 : index
    %c0_5 = arith.constant 0 : index
    %18 = vector.load %arg2[%c0_4, %c0_5] : memref<27x32xbf16, #tpu.memory_space<vmem>>, vector<27x32xbf16>
    %cst_6 = arith.constant dense<0.000000e+00> : vector<256x32xf32>
    %19 = tpu.matmul %17, %18, %cst_6 {dimension_numbers = #tpu.dot_dimension_numbers<[1], [0], [0], [1], [0, 0, 1, 1], [], []>} : vector<256x27xbf16>, vector<27x32xbf16>, vector<256x32xf32> -> vector<256x32xf32>
    %c0_7 = arith.constant 0 : index
    %c0_8 = arith.constant 0 : index
    %20 = vector.load %arg3[%c0_7, %c0_8] : memref<1x32xf32, #tpu.memory_space<vmem>>, vector<1x32xf32>
    %21 = vector.broadcast %20 : vector<1x32xf32> to vector<256x32xf32>
    %22 = arith.addf %19, %21 : vector<256x32xf32>
    %cst_9 = arith.constant 0.000000e+00 : f32
    %23 = vector.broadcast %cst_9 : f32 to vector<256x32xf32>
    %24 = arith.maximumf %22, %23 : vector<256x32xf32>
    %25 = arith.truncf %24 : vector<256x32xf32> to vector<256x32xbf16>
    %c0_10 = arith.constant 0 : index
    %c0_11 = arith.constant 0 : index
    %26 = vector.load %arg4[%c0_10, %c0_11] : memref<4x32xbf16, #tpu.memory_space<vmem>>, vector<4x32xbf16>
    %cst_12 = arith.constant dense<0.000000e+00> : vector<4x256xf32>
    %27 = tpu.matmul %26, %25, %cst_12 {dimension_numbers = #tpu.dot_dimension_numbers<[1], [1], [0], [0], [0, 0, 1, 0], [], []>} : vector<4x32xbf16>, vector<256x32xbf16>, vector<4x256xf32> -> vector<4x256xf32>
    %c0_13 = arith.constant 0 : index
    %c0_14 = arith.constant 0 : index
    %28 = vector.load %arg5[%c0_13, %c0_14] : memref<4x1xf32, #tpu.memory_space<vmem>>, vector<4x1xf32>
    %29 = vector.broadcast %28 : vector<4x1xf32> to vector<4x256xf32>
    %30 = arith.addf %27, %29 : vector<4x256xf32>
    %c0_15 = arith.constant 0 : index
    %c0_16 = arith.constant 0 : index
    %c0_17 = arith.constant 0 : index
    %31 = vector.load %arg6[%c0_15, %c0_16, %c0_17] : memref<1x4x256xf32, #tpu.memory_space<vmem>>, vector<1x4x256xf32>
    %32 = vector.shape_cast %31 : vector<1x4x256xf32> to vector<4x256xf32>
    %33 = vector.shape_cast %30 : vector<4x256xf32> to vector<1x4x256xf32>
    tpu.vector_store %arg6[%c0_15, %c0_16, %c0_17], %33 {strides = array<i32>} : memref<1x4x256xf32, #tpu.memory_space<vmem>>, vector<1x4x256xf32>,
    return
  }
  func.func @transform_0(%arg0: i32) -> (i32, i32, i32, i32) {
    %c0_i32 = arith.constant 0 : i32
    %c0_i32_0 = arith.constant 0 : i32
    %c0_i32_1 = arith.constant 0 : i32
    %c0_i32_2 = arith.constant 0 : i32
    return %arg0, %c0_i32, %c0_i32_0, %c0_i32_1 : i32, i32, i32, i32
  }
  func.func @transform_1(%arg0: i32) -> (i32, i32) {
    %c0_i32 = arith.constant 0 : i32
    %c0_i32_0 = arith.constant 0 : i32
    %c0_i32_1 = arith.constant 0 : i32
    return %c0_i32, %c0_i32_0 : i32, i32
  }
  func.func @transform_2(%arg0: i32) -> (i32, i32) {
    %c0_i32 = arith.constant 0 : i32
    %c0_i32_0 = arith.constant 0 : i32
    %c0_i32_1 = arith.constant 0 : i32
    return %c0_i32, %c0_i32_0 : i32, i32
  }
  func.func @transform_3(%arg0: i32) -> (i32, i32) {
    %c0_i32 = arith.constant 0 : i32
    %c0_i32_0 = arith.constant 0 : i32
    %c0_i32_1 = arith.constant 0 : i32
    return %c0_i32, %c0_i32_0 : i32, i32
  }
  func.func @transform_4(%arg0: i32) -> (i32, i32) {
    %c0_i32 = arith.constant 0 : i32
    %c0_i32_0 = arith.constant 0 : i32
    %c0_i32_1 = arith.constant 0 : i32
    return %c0_i32, %c0_i32_0 : i32, i32
  }
  func.func @transform_5(%arg0: i32) -> (i32, i32, i32) {
    %c0_i32 = arith.constant 0 : i32
    %c0_i32_0 = arith.constant 0 : i32
    %c0_i32_1 = arith.constant 0 : i32
    return %arg0, %c0_i32, %c0_i32_0 : i32, i32, i32
  }
}

</mosaic_0001>

<llo_original>
// kernel: tpu_custom_call.1
$region0: #{tpu_custom_call.1}
  #allocation0 [shape = 'u32[]', space=smem, size = 0x4, offset = 0x4, fixed_abs, tag = 'smem constant byte address 0x4 - core index']
  #allocation1 [shape = 'u32[144,128]{1,0:T(1,128)}', space=vmem, size = 0x12000, scoped, tag = 'internal scratch']
  %s0 = inlined_call_operand.vmem [shape: f32[2,16,16,3], index: 0, kind: input, shape index: {}]
  %s1 = inlined_call_operand.vmem [shape: bf16[27,32], index: 1, kind: input, shape index: {}]
  %s2 = inlined_call_operand.vmem [shape: f32[1,32], index: 2, kind: input, shape index: {}]
  %s3 = inlined_call_operand.vmem [shape: bf16[4,32], index: 3, kind: input, shape index: {}]
  %s4 = inlined_call_operand.vmem [shape: f32[4,1], index: 4, kind: input, shape index: {}]
  %s5 = inlined_call_operand.hbm [shape: f32[2,4,256], index: 5, kind: output, shape index: {}]
  %s6 = sld [smem:[#allocation0]]
  $region53: #{tpu_custom_call.1} parent=0
    _
  %s8 = ssub.s32 1, %s6
  %s9 = scalar_select 0, %s8, %s6
  $region1: #{tpu_custom_call.1} parent=0
    #allocation2 [shape = 'u8[8192]{0}', space=vmem, size = 0x2000, scoped, tag = 'output window, operand 0']
    #allocation3 [shape = 's32[2]{0}', space=sflag, size = 0x8, scoped, tag = 'scoped memory for tpu_custom_call.1']
    %10 = vsyncpa [#allocation3], 0
    %s11 = scalar_lea.sflag [#allocation3], 1
    %12 = vsyncpa %s11, 0
    loop: start=0, step=1, limit=4
    $region2: #{tpu_custom_call.1} parent=1 // loop_pre_header
      _
    $region3: #{tpu_custom_call.1} parent=1 // loop_header
      %s14 = sphi 0, %s18
      %p15 = scmp.ge.s32.totalorder %s14, 4
      %s24 = sphi 0, %s26
      %s27 = sphi 0, %s24
      %s28 = sphi 0, %s27
      %s44 = sphi 0, %s28
      %s48 = sphi 0, %s48
      %s50 = sphi 0, %s48
      %s51 = sphi 0, %s50
      %s65 = sphi 0, %s51
      %s69 = sphi 0, %s69
      %s71 = sphi 0, %s69
      %s72 = sphi 0, %s71
      %s86 = sphi 0, %s72
      %s90 = sphi 0, %s90
      %s92 = sphi 0, %s90
      %s93 = sphi 0, %s92
      %s107 = sphi 0, %s93
      %s111 = sphi 0, %s111
      %s113 = sphi 0, %s111
      %s114 = sphi 0, %s113
      %s128 = sphi 0, %s114
      %s134 = sphi 0, %s136
      %s137 = sphi 0, %s134
      %s138 = sphi 0, %s137
      %s154 = sphi 0, %s138
    $region4: #{tpu_custom_call.1} parent=1 // loop_header_branch
      %17 = sbr.rel (%p15) target = $region8
    $region5: #{tpu_custom_call.1} parent=1 // loop_body
      %s19 = ssub.s32 %s14, 1
      %s20 = ssub.s32 %s14, 2
      %s21 = sadd.s32 %s14, 1
      %s22 = ssub.s32 %s14, %s21
      %p23 = scmp.eq.s32.totalorder %s22, 0
      %s25 = sadd.s32 %s24, 1
      %s26 = scalar_select %p23, %s24, %s25
      %p29 = pneg %p23
      %p30 = scmp.eq.s32.totalorder %s14, 1
      %p31 = por %p29, %p30
      %p32 = scmp.ne.s32.totalorder %s24, %s27
      %p33 = scmp.eq.s32.totalorder %s14, 0
      %p34 = por %p32, %p33
      %p35 = scmp.ne.s32.totalorder %s24, %s27
      %p36 = scmp.eq.s32.totalorder %s19, 1
      %p37 = por %p35, %p36
      %p38 = scmp.ne.s32.totalorder %s27, %s28
      %p39 = scmp.eq.s32.totalorder %s19, 0
      %p40 = por %p38, %p39
      %p41 = scmp.ne.s32.totalorder %s27, %s28
      %p42 = scmp.eq.s32.totalorder %s20, 1
      %p43 = por %p41, %p42
      %p45 = scmp.ne.s32.totalorder %s28, %s44
      %p46 = scmp.eq.s32.totalorder %s20, 0
      %p47 = por %p45, %p46
      %s49 = sadd.s32 %s48, 1
      %p52 = scmp.eq.s32.totalorder %s14, 1
      %p53 = scmp.ne.s32.totalorder %s48, %s50
      %p54 = scmp.eq.s32.totalorder %s14, 0
      %p55 = por %p53, %p54
      %p56 = scmp.ne.s32.totalorder %s48, %s50
      %p57 = scmp.eq.s32.totalorder %s19, 1
      %p58 = por %p56, %p57
      %p59 = scmp.ne.s32.totalorder %s50, %s51
      %p60 = scmp.eq.s32.totalorder %s19, 0
      %p61 = por %p59, %p60
      %p62 = scmp.ne.s32.totalorder %s50, %s51
      %p63 = scmp.eq.s32.totalorder %s20, 1
      %p64 = por %p62, %p63
      %p66 = scmp.ne.s32.totalorder %s51, %s65
      %p67 = scmp.eq.s32.totalorder %s20, 0
      %p68 = por %p66, %p67
      %s70 = sadd.s32 %s69, 1
      %p73 = scmp.eq.s32.totalorder %s14, 1
      %p74 = scmp.ne.s32.totalorder %s69, %s71
      %p75 = scmp.eq.s32.totalorder %s14, 0
      %p76 = por %p74, %p75
      %p77 = scmp.ne.s32.totalorder %s69, %s71
      %p78 = scmp.eq.s32.totalorder %s19, 1
      %p79 = por %p77, %p78
      %p80 = scmp.ne.s32.totalorder %s71, %s72
      %p81 = scmp.eq.s32.totalorder %s19, 0
      %p82 = por %p80, %p81
      %p83 = scmp.ne.s32.totalorder %s71, %s72
      %p84 = scmp.eq.s32.totalorder %s20, 1
      %p85 = por %p83, %p84
      %p87 = scmp.ne.s32.totalorder %s72, %s86
      %p88 = scmp.eq.s32.totalorder %s20, 0
      %p89 = por %p87, %p88
      %s91 = sadd.s32 %s90, 1
      %p94 = scmp.eq.s32.totalorder %s14, 1
      %p95 = scmp.ne.s32.totalorder %s90, %s92
      %p96 = scmp.eq.s32.totalorder %s14, 0
      %p97 = por %p95, %p96
      %p98 = scmp.ne.s32.totalorder %s90, %s92
      %p99 = scmp.eq.s32.totalorder %s19, 1
      %p100 = por %p98, %p99
      %p101 = scmp.ne.s32.totalorder %s92, %s93
      %p102 = scmp.eq.s32.totalorder %s19, 0
      %p103 = por %p101, %p102
      %p104 = scmp.ne.s32.totalorder %s92, %s93
      %p105 = scmp.eq.s32.totalorder %s20, 1
      %p106 = por %p104, %p105
      %p108 = scmp.ne.s32.totalorder %s93, %s107
      %p109 = scmp.eq.s32.totalorder %s20, 0
      %p110 = por %p108, %p109
      %s112 = sadd.s32 %s111, 1
      %p115 = scmp.eq.s32.totalorder %s14, 1
      %p116 = scmp.ne.s32.totalorder %s111, %s113
      %p117 = scmp.eq.s32.totalorder %s14, 0
      %p118 = por %p116, %p117
      %p119 = scmp.ne.s32.totalorder %s111, %s113
      %p120 = scmp.eq.s32.totalorder %s19, 1
      %p121 = por %p119, %p120
      %p122 = scmp.ne.s32.totalorder %s113, %s114
      %p123 = scmp.eq.s32.totalorder %s19, 0
      %p124 = por %p122, %p123
      %p125 = scmp.ne.s32.totalorder %s113, %s114
      %p126 = scmp.eq.s32.totalorder %s20, 1
      %p127 = por %p125, %p126
      %p129 = scmp.ne.s32.totalorder %s114, %s128
      %p130 = scmp.eq.s32.totalorder %s20, 0
      %p131 = por %p129, %p130
      %s132 = ssub.s32 %s14, %s21
      %p133 = scmp.eq.s32.totalorder %s132, 0
      %s135 = sadd.s32 %s134, 1
      %s136 = scalar_select %p133, %s134, %s135
      %p139 = pneg %p133
      %p140 = scmp.eq.s32.totalorder %s14, 1
      %p141 = por %p139, %p140
      %p142 = scmp.ne.s32.totalorder %s134, %s137
      %p143 = scmp.eq.s32.totalorder %s14, 0
      %p144 = por %p142, %p143
      %p145 = scmp.ne.s32.totalorder %s134, %s137
      %p146 = scmp.eq.s32.totalorder %s19, 1
      %p147 = por %p145, %p146
      %p148 = scmp.ne.s32.totalorder %s137, %s138
      %p149 = scmp.eq.s32.totalorder %s19, 0
      %p150 = por %p148, %p149
      %p151 = scmp.ne.s32.totalorder %s137, %s138
      %p152 = scmp.eq.s32.totalorder %s20, 1
      %p153 = por %p151, %p152
      %p155 = scmp.ne.s32.totalorder %s138, %s154
      %p156 = scmp.eq.s32.totalorder %s20, 0
      %p157 = por %p155, %p156
      %p158 = scmp.le.s32.totalorder 1, %s14
      %p159 = scmp.lt.s32.totalorder %s14, 3
      %p160 = pnand %p158, %p159
      %p161 = pneg %p160
      // Predicated region
      $region9: #{tpu_custom_call.1} parent=5 // pred_check
        _
      $region10: #{tpu_custom_call.1} parent=5 // pred_check_branch
        %163 = sbr.rel (%p160) target = $region12
      $region11: #{tpu_custom_call.1} parent=5 // pred_region
        %s164 = ssub.s32 %s14, 1
        // Predicated region
        $region13: #{tpu_custom_call.1} parent=11 // pred_check
          %p165 = pneg %p61
        $region14: #{tpu_custom_call.1} parent=11 // pred_check_branch
          %167 = sbr.rel (%p165) target = $region16
        $region15: #{tpu_custom_call.1} parent=11 // pred_region
          _
        $region16: #{tpu_custom_call.1} parent=11 // pred_fallthru
          _
        // Predicated region
        $region17: #{tpu_custom_call.1} parent=11 // pred_check
          %p168 = pneg %p82
        $region18: #{tpu_custom_call.1} parent=11 // pred_check_branch
          %170 = sbr.rel (%p168) target = $region20
        $region19: #{tpu_custom_call.1} parent=11 // pred_region
          _
        $region20: #{tpu_custom_call.1} parent=11 // pred_fallthru
          _
        // Predicated region
        $region21: #{tpu_custom_call.1} parent=11 // pred_check
          %p171 = pneg %p103
        $region22: #{tpu_custom_call.1} parent=11 // pred_check_branch
          %173 = sbr.rel (%p171) target = $region24
        $region23: #{tpu_custom_call.1} parent=11 // pred_region
          _
        $region24: #{tpu_custom_call.1} parent=11 // pred_fallthru
          _
        // Predicated region
        $region25: #{tpu_custom_call.1} parent=11 // pred_check
          %p174 = pneg %p124
        $region26: #{tpu_custom_call.1} parent=11 // pred_check_branch
          %176 = sbr.rel (%p174) target = $region28
        $region27: #{tpu_custom_call.1} parent=11 // pred_region
          _
        $region28: #{tpu_custom_call.1} parent=11 // pred_fallthru
          _
      $region12: #{tpu_custom_call.1} parent=5 // pred_fallthru
        _
      %p177 = scmp.lt.s32.totalorder %s14, 2
      // Predicated region
      $region29: #{tpu_custom_call.1} parent=5 // pred_check
        %p178 = pneg %p177
      $region30: #{tpu_custom_call.1} parent=5 // pred_check_branch
        %180 = sbr.rel (%p178) target = $region32
      $region31: #{tpu_custom_call.1} parent=5 // pred_region
        // Predicated region
        $region33: #{tpu_custom_call.1} parent=31 // pred_check
          %p181 = pneg %p34
        $region34: #{tpu_custom_call.1} parent=31 // pred_check_branch
          %183 = sbr.rel (%p181) target = $region36
        $region35: #{tpu_custom_call.1} parent=31 // pred_region
          %p184 = scmp.lt.s32.totalorder %s14, 1
          %s185 = scalar_select %p184, %s14, 1
          %s186 = smul.addr %s185, 32
          %s187 = smul.addr %s186, 8
          %s188 = scalar_lea.vmem %s0, %s187
        $region36: #{tpu_custom_call.1} parent=31 // pred_fallthru
          _
      $region32: #{tpu_custom_call.1} parent=5 // pred_fallthru
        _
      %p189 = scmp.le.s32.totalorder 1, %s14
      %p190 = scmp.lt.s32.totalorder %s14, 3
      %p191 = pnand %p189, %p190
      %p192 = pneg %p191
      // Predicated region
      $region37: #{tpu_custom_call.1} parent=5 // pred_check
        _
      $region38: #{tpu_custom_call.1} parent=5 // pred_check_branch
        %194 = sbr.rel (%p191) target = $region40
      $region39: #{tpu_custom_call.1} parent=5 // pred_region
        %s195 = ssub.s32 %s14, 1
        %p196 = scmp.lt.s32.totalorder %s19, 1
        %s197 = scalar_select %p196, %s19, 1
        %s198 = smul.addr %s197, 32
        %s199 = smul.addr %s198, 8
        %s200 = scalar_lea.vmem %s0, %s199
        %p201 = pneg %p40
        %p202 = pneg %p37
        %p203 = pneg %p61
        %p204 = pneg %p58
        %p205 = pneg %p82
        %p206 = pneg %p79
        %p207 = pneg %p103
        %p208 = pneg %p100
        %p209 = pneg %p124
        %p210 = pneg %p121
        %p211 = pneg %p150
        %p212 = pneg %p147
        %s213 = sand.u32 %s137, 1
        %s214 = scalar_lea.sflag [#allocation3], %s213
        %s215 = sand.u32 %s137, 1
        %s216 = smul.addr %s215, 8
        %s217 = scalar_lea.vmem [#allocation2], %s216
        %p218 = scmp.lt.s32.totalorder %s19, 1
        %s219 = scalar_select %p218, %s19, 1
        %s220 = smul.addr %s219, 32
        %s221 = smul.addr %s220, 8
        %s222 = scalar_lea.vmem %s0, %s221
        %v224 = vld [vmem:[%s222] sm:$0xff]
        %v225 = vld [vmem:[%s222 + $0x8] sm:$0xff]
        %v226 = vld [vmem:[%s222 + $0x10] sm:$0xff]
        %v227 = vld [vmem:[%s222 + $0x18] sm:$0xff]
        %v228 = vld [vmem:[%s222 + $0x20] sm:$0xff]
        %v229 = vld [vmem:[%s222 + $0x28] sm:$0xff]
        %v230 = vld [vmem:[%s222 + $0x30] sm:$0xff]
        %v231 = vld [vmem:[%s222 + $0x38] sm:$0xff]
        %v232 = vld [vmem:[%s222 + $0x40] sm:$0xff]
        %v233 = vld [vmem:[%s222 + $0x48] sm:$0xff]
        %v234 = vld [vmem:[%s222 + $0x50] sm:$0xff]
        %v235 = vld [vmem:[%s222 + $0x58] sm:$0xff]
        %v236 = vld [vmem:[%s222 + $0x60] sm:$0xff]
        %v237 = vld [vmem:[%s222 + $0x68] sm:$0xff]
        %v238 = vld [vmem:[%s222 + $0x70] sm:$0xff]
        %v239 = vld [vmem:[%s222 + $0x78] sm:$0xff]
        %v240 = vld [vmem:[%s222 + $0x80] sm:$0xff]
        %v241 = vld [vmem:[%s222 + $0x88] sm:$0xff]
        %v242 = vld [vmem:[%s222 + $0x90] sm:$0xff]
        %v243 = vld [vmem:[%s222 + $0x98] sm:$0xff]
        %v244 = vld [vmem:[%s222 + $0xa0] sm:$0xff]
        %v245 = vld [vmem:[%s222 + $0xa8] sm:$0xff]
        %v246 = vld [vmem:[%s222 + $0xb0] sm:$0xff]
        %v247 = vld [vmem:[%s222 + $0xb8] sm:$0xff]
        %v248 = vld [vmem:[%s222 + $0xc0] sm:$0xff]
        %v249 = vld [vmem:[%s222 + $0xc8] sm:$0xff]
        %v250 = vld [vmem:[%s222 + $0xd0] sm:$0xff]
        %v251 = vld [vmem:[%s222 + $0xd8] sm:$0xff]
        %v252 = vld [vmem:[%s222 + $0xe0] sm:$0xff]
        %v253 = vld [vmem:[%s222 + $0xe8] sm:$0xff]
        %v254 = vld [vmem:[%s222 + $0xf0] sm:$0xff]
        %v255 = vld [vmem:[%s222 + $0xf8] sm:$0xff]
        %vm289 = vcmask 1040384
        %v290 = vrot.slane 0.0, 7
        %v291 = vsel %vm289, %v290, %v290
        %v292 = vrot.slane %v224, 7
        %v293 = vrot.slane %v225, 7
        %v294 = vsel %vm289, %v292, %v293
        %v295 = vrot.slane %v226, 7
        %v296 = vrot.slane %v227, 7
        %v297 = vsel %vm289, %v295, %v296
        %v298 = vrot.slane %v228, 7
        %v299 = vrot.slane %v229, 7
        %v300 = vsel %vm289, %v298, %v299
        %v301 = vrot.slane %v230, 7
        %v302 = vrot.slane %v231, 7
        %v303 = vsel %vm289, %v301, %v302
        %v304 = vrot.slane %v232, 7
        %v305 = vrot.slane %v233, 7
        %v306 = vsel %vm289, %v304, %v305
        %v307 = vrot.slane %v234, 7
        %v308 = vrot.slane %v235, 7
        %v309 = vsel %vm289, %v307, %v308
        %v310 = vrot.slane %v236, 7
        %v311 = vrot.slane %v237, 7
        %v312 = vsel %vm289, %v310, %v311
        %v313 = vrot.slane %v238, 7
        %v314 = vrot.slane %v239, 7
        %v315 = vsel %vm289, %v313, %v314
        %v316 = vrot.slane %v240, 7
        %v317 = vrot.slane %v241, 7
        %v318 = vsel %vm289, %v316, %v317
        %v319 = vrot.slane %v242, 7
        %v320 = vrot.slane %v243, 7
        %v321 = vsel %vm289, %v319, %v320
        %v322 = vrot.slane %v244, 7
        %v323 = vrot.slane %v245, 7
        %v324 = vsel %vm289, %v322, %v323
        %v325 = vrot.slane %v246, 7
        %v326 = vrot.slane %v247, 7
        %v327 = vsel %vm289, %v325, %v326
        %v328 = vrot.slane %v248, 7
        %v329 = vrot.slane %v249, 7
        %v330 = vsel %vm289, %v328, %v329
        %v331 = vrot.slane %v250, 7
        %v332 = vrot.slane %v251, 7
        %v333 = vsel %vm289, %v331, %v332
        %v334 = vrot.slane %v252, 7
        %v335 = vrot.slane %v253, 7
        %v336 = vsel %vm289, %v334, %v335
        %v337 = vrot.slane %v254, 7
        %v338 = vrot.slane %v255, 7
        %v339 = vsel %vm289, %v337, %v338
        %v389 = vsel %vm289, 0.0, %v290
        %v390 = vsel %vm289, 0.0, %v292
        %v391 = vsel %vm289, 0.0, %v295
        %v392 = vsel %vm289, 0.0, %v298
        %v393 = vsel %vm289, 0.0, %v301
        %v394 = vsel %vm289, 0.0, %v304
        %v395 = vsel %vm289, 0.0, %v307
        %v396 = vsel %vm289, 0.0, %v310
        %v397 = vsel %vm289, 0.0, %v313
        %v398 = vsel %vm289, 0.0, %v316
        %v399 = vsel %vm289, 0.0, %v319
        %v400 = vsel %vm289, 0.0, %v322
        %v401 = vsel %vm289, 0.0, %v325
        %v402 = vsel %vm289, 0.0, %v328
        %v403 = vsel %vm289, 0.0, %v331
        %v404 = vsel %vm289, 0.0, %v334
        %v405 = vsel %vm289, 0.0, %v337
        %v406 = vsel %vm289, %v290, 0.0
        %v407 = vsel %vm289, %v293, 0.0
        %v408 = vsel %vm289, %v296, 0.0
        %v409 = vsel %vm289, %v299, 0.0
        %v410 = vsel %vm289, %v302, 0.0
        %v411 = vsel %vm289, %v305, 0.0
        %v412 = vsel %vm289, %v308, 0.0
        %v413 = vsel %vm289, %v311, 0.0
        %v414 = vsel %vm289, %v314, 0.0
        %v415 = vsel %vm289, %v317, 0.0
        %v416 = vsel %vm289, %v320, 0.0
        %v417 = vsel %vm289, %v323, 0.0
        %v418 = vsel %vm289, %v326, 0.0
        %v419 = vsel %vm289, %v329, 0.0
        %v420 = vsel %vm289, %v332, 0.0
        %v421 = vsel %vm289, %v335, 0.0
        %v422 = vsel %vm289, %v338, 0.0
        %vm455 = vcmask 1046528
        %v456 = vrot.slane %v389, 1
        %v457 = vrot.slane %v291, 1
        %v458 = vsel %vm455, %v456, %v457
        %v459 = vrot.slane %v406, 1
        %v460 = vsel %vm455, %v457, %v459
        %v461 = vrot.slane %v390, 1
        %v462 = vrot.slane %v294, 1
        %v463 = vsel %vm455, %v461, %v462
        %v464 = vrot.slane %v407, 1
        %v465 = vsel %vm455, %v462, %v464
        %v466 = vrot.slane %v391, 1
        %v467 = vrot.slane %v297, 1
        %v468 = vsel %vm455, %v466, %v467
        %v469 = vrot.slane %v408, 1
        %v470 = vsel %vm455, %v467, %v469
        %v471 = vrot.slane %v392, 1
        %v472 = vrot.slane %v300, 1
        %v473 = vsel %vm455, %v471, %v472
        %v474 = vrot.slane %v409, 1
        %v475 = vsel %vm455, %v472, %v474
        %v476 = vrot.slane %v393, 1
        %v477 = vrot.slane %v303, 1
        %v478 = vsel %vm455, %v476, %v477
        %v479 = vrot.slane %v410, 1
        %v480 = vsel %vm455, %v477, %v479
        %v481 = vrot.slane %v394, 1
        %v482 = vrot.slane %v306, 1
        %v483 = vsel %vm455, %v481, %v482
        %v484 = vrot.slane %v411, 1
        %v485 = vsel %vm455, %v482, %v484
        %v486 = vrot.slane %v395, 1
        %v487 = vrot.slane %v309, 1
        %v488 = vsel %vm455, %v486, %v487
        %v489 = vrot.slane %v412, 1
        %v490 = vsel %vm455, %v487, %v489
        %v491 = vrot.slane %v396, 1
        %v492 = vrot.slane %v312, 1
        %v493 = vsel %vm455, %v491, %v492
        %v494 = vrot.slane %v413, 1
        %v495 = vsel %vm455, %v492, %v494
        %v496 = vrot.slane %v397, 1
        %v497 = vrot.slane %v315, 1
        %v498 = vsel %vm455, %v496, %v497
        %v499 = vrot.slane %v414, 1
        %v500 = vsel %vm455, %v497, %v499
        %v501 = vrot.slane %v398, 1
        %v502 = vrot.slane %v318, 1
        %v503 = vsel %vm455, %v501, %v502
        %v504 = vrot.slane %v415, 1
        %v505 = vsel %vm455, %v502, %v504
        %v506 = vrot.slane %v399, 1
        %v507 = vrot.slane %v321, 1
        %v508 = vsel %vm455, %v506, %v507
        %v509 = vrot.slane %v416, 1
        %v510 = vsel %vm455, %v507, %v509
        %v511 = vrot.slane %v400, 1
        %v512 = vrot.slane %v324, 1
        %v513 = vsel %vm455, %v511, %v512
        %v514 = vrot.slane %v417, 1
        %v515 = vsel %vm455, %v512, %v514
        %v516 = vrot.slane %v401, 1
        %v517 = vrot.slane %v327, 1
        %v518 = vsel %vm455, %v516, %v517
        %v519 = vrot.slane %v418, 1
        %v520 = vsel %vm455, %v517, %v519
        %v521 = vrot.slane %v402, 1
        %v522 = vrot.slane %v330, 1
        %v523 = vsel %vm455, %v521, %v522
        %v524 = vrot.slane %v419, 1
        %v525 = vsel %vm455, %v522, %v524
        %v526 = vrot.slane %v403, 1
        %v527 = vrot.slane %v333, 1
        %v528 = vsel %vm455, %v526, %v527
        %v529 = vrot.slane %v420, 1
        %v530 = vsel %vm455, %v527, %v529
        %v531 = vrot.slane %v404, 1
        %v532 = vrot.slane %v336, 1
        %v533 = vsel %vm455, %v531, %v532
        %v534 = vrot.slane %v421, 1
        %v535 = vsel %vm455, %v532, %v534
        %536 = vrot.lane.b32.xlu0 %v458, 3
        %v537 = vpop.permute.xlu0 %536
        %538 = vrot.lane.b32.xlu0 %v460, 3
        %v539 = vpop.permute.xlu0 %538
        %540 = vrot.lane.b32.xlu0 %v463, 3
        %v541 = vpop.permute.xlu0 %540
        %542 = vrot.lane.b32.xlu0 %v465, 3
        %v543 = vpop.permute.xlu0 %542
        %544 = vrot.lane.b32.xlu0 %v468, 3
        %v545 = vpop.permute.xlu0 %544
        %546 = vrot.lane.b32.xlu0 %v470, 3
        %v547 = vpop.permute.xlu0 %546
        %548 = vrot.lane.b32.xlu0 %v473, 3
        %v549 = vpop.permute.xlu0 %548
        %550 = vrot.lane.b32.xlu0 %v475, 3
        %v551 = vpop.permute.xlu0 %550
        %552 = vrot.lane.b32.xlu0 %v478, 3
        %v553 = vpop.permute.xlu0 %552
        %554 = vrot.lane.b32.xlu0 %v480, 3
        %v555 = vpop.permute.xlu0 %554
        %556 = vrot.lane.b32.xlu0 %v483, 3
        %v557 = vpop.permute.xlu0 %556
        %558 = vrot.lane.b32.xlu0 %v485, 3
        %v559 = vpop.permute.xlu0 %558
        %560 = vrot.lane.b32.xlu0 %v488, 3
        %v561 = vpop.permute.xlu0 %560
        %562 = vrot.lane.b32.xlu0 %v490, 3
        %v563 = vpop.permute.xlu0 %562
        %564 = vrot.lane.b32.xlu0 %v493, 3
        %v565 = vpop.permute.xlu0 %564
        %566 = vrot.lane.b32.xlu0 %v495, 3
        %v567 = vpop.permute.xlu0 %566
        %568 = vrot.lane.b32.xlu0 %v498, 3
        %v569 = vpop.permute.xlu0 %568
        %570 = vrot.lane.b32.xlu0 %v500, 3
        %v571 = vpop.permute.xlu0 %570
        %572 = vrot.lane.b32.xlu0 %v503, 3
        %v573 = vpop.permute.xlu0 %572
        %574 = vrot.lane.b32.xlu0 %v505, 3
        %v575 = vpop.permute.xlu0 %574
        %576 = vrot.lane.b32.xlu0 %v508, 3
        %v577 = vpop.permute.xlu0 %576
        %578 = vrot.lane.b32.xlu0 %v510, 3
        %v579 = vpop.permute.xlu0 %578
        %580 = vrot.lane.b32.xlu0 %v513, 3
        %v581 = vpop.permute.xlu0 %580
        %582 = vrot.lane.b32.xlu0 %v515, 3
        %v583 = vpop.permute.xlu0 %582
        %584 = vrot.lane.b32.xlu0 %v518, 3
        %v585 = vpop.permute.xlu0 %584
        %586 = vrot.lane.b32.xlu0 %v520, 3
        %v587 = vpop.permute.xlu0 %586
        %588 = vrot.lane.b32.xlu0 %v523, 3
        %v589 = vpop.permute.xlu0 %588
        %590 = vrot.lane.b32.xlu0 %v525, 3
        %v591 = vpop.permute.xlu0 %590
        %592 = vrot.lane.b32.xlu0 %v528, 3
        %v593 = vpop.permute.xlu0 %592
        %594 = vrot.lane.b32.xlu0 %v530, 3
        %v595 = vpop.permute.xlu0 %594
        %596 = vrot.lane.b32.xlu0 %v533, 3
        %v597 = vpop.permute.xlu0 %596
        %598 = vrot.lane.b32.xlu0 %v535, 3
        %v599 = vpop.permute.xlu0 %598
        %vm632 = vcmask 1045504
        %v633 = vrot.slane %v389, 2
        %v634 = vrot.slane %v291, 2
        %v635 = vsel %vm632, %v633, %v634
        %v636 = vrot.slane %v406, 2
        %v637 = vsel %vm632, %v634, %v636
        %v638 = vrot.slane %v390, 2
        %v639 = vrot.slane %v294, 2
        %v640 = vsel %vm632, %v638, %v639
        %v641 = vrot.slane %v407, 2
        %v642 = vsel %vm632, %v639, %v641
        %v643 = vrot.slane %v391, 2
        %v644 = vrot.slane %v297, 2
        %v645 = vsel %vm632, %v643, %v644
        %v646 = vrot.slane %v408, 2
        %v647 = vsel %vm632, %v644, %v646
        %v648 = vrot.slane %v392, 2
        %v649 = vrot.slane %v300, 2
        %v650 = vsel %vm632, %v648, %v649
        %v651 = vrot.slane %v409, 2
        %v652 = vsel %vm632, %v649, %v651
        %v653 = vrot.slane %v393, 2
        %v654 = vrot.slane %v303, 2
        %v655 = vsel %vm632, %v653, %v654
        %v656 = vrot.slane %v410, 2
        %v657 = vsel %vm632, %v654, %v656
        %v658 = vrot.slane %v394, 2
        %v659 = vrot.slane %v306, 2
        %v660 = vsel %vm632, %v658, %v659
        %v661 = vrot.slane %v411, 2
        %v662 = vsel %vm632, %v659, %v661
        %v663 = vrot.slane %v395, 2
        %v664 = vrot.slane %v309, 2
        %v665 = vsel %vm632, %v663, %v664
        %v666 = vrot.slane %v412, 2
        %v667 = vsel %vm632, %v664, %v666
        %v668 = vrot.slane %v396, 2
        %v669 = vrot.slane %v312, 2
        %v670 = vsel %vm632, %v668, %v669
        %v671 = vrot.slane %v413, 2
        %v672 = vsel %vm632, %v669, %v671
        %v673 = vrot.slane %v397, 2
        %v674 = vrot.slane %v315, 2
        %v675 = vsel %vm632, %v673, %v674
        %v676 = vrot.slane %v414, 2
        %v677 = vsel %vm632, %v674, %v676
        %v678 = vrot.slane %v398, 2
        %v679 = vrot.slane %v318, 2
        %v680 = vsel %vm632, %v678, %v679
        %v681 = vrot.slane %v415, 2
        %v682 = vsel %vm632, %v679, %v681
        %v683 = vrot.slane %v399, 2
        %v684 = vrot.slane %v321, 2
        %v685 = vsel %vm632, %v683, %v684
        %v686 = vrot.slane %v416, 2
        %v687 = vsel %vm632, %v684, %v686
        %v688 = vrot.slane %v400, 2
        %v689 = vrot.slane %v324, 2
        %v690 = vsel %vm632, %v688, %v689
        %v691 = vrot.slane %v417, 2
        %v692 = vsel %vm632, %v689, %v691
        %v693 = vrot.slane %v401, 2
        %v694 = vrot.slane %v327, 2
        %v695 = vsel %vm632, %v693, %v694
        %v696 = vrot.slane %v418, 2
        %v697 = vsel %vm632, %v694, %v696
        %v698 = vrot.slane %v402, 2
        %v699 = vrot.slane %v330, 2
        %v700 = vsel %vm632, %v698, %v699
        %v701 = vrot.slane %v419, 2
        %v702 = vsel %vm632, %v699, %v701
        %v703 = vrot.slane %v403, 2
        %v704 = vrot.slane %v333, 2
        %v705 = vsel %vm632, %v703, %v704
        %v706 = vrot.slane %v420, 2
        %v707 = vsel %vm632, %v704, %v706
        %v708 = vrot.slane %v404, 2
        %v709 = vrot.slane %v336, 2
        %v710 = vsel %vm632, %v708, %v709
        %v711 = vrot.slane %v421, 2
        %v712 = vsel %vm632, %v709, %v711
        %713 = vrot.lane.b32.xlu0 %v635, 6
        %v714 = vpop.permute.xlu0 %713
        %715 = vrot.lane.b32.xlu0 %v637, 6
        %v716 = vpop.permute.xlu0 %715
        %717 = vrot.lane.b32.xlu0 %v640, 6
        %v718 = vpop.permute.xlu0 %717
        %719 = vrot.lane.b32.xlu0 %v642, 6
        %v720 = vpop.permute.xlu0 %719
        %721 = vrot.lane.b32.xlu0 %v645, 6
        %v722 = vpop.permute.xlu0 %721
        %723 = vrot.lane.b32.xlu0 %v647, 6
        %v724 = vpop.permute.xlu0 %723
        %725 = vrot.lane.b32.xlu0 %v650, 6
        %v726 = vpop.permute.xlu0 %725
        %727 = vrot.lane.b32.xlu0 %v652, 6
        %v728 = vpop.permute.xlu0 %727
        %729 = vrot.lane.b32.xlu0 %v655, 6
        %v730 = vpop.permute.xlu0 %729
        %731 = vrot.lane.b32.xlu0 %v657, 6
        %v732 = vpop.permute.xlu0 %731
        %733 = vrot.lane.b32.xlu0 %v660, 6
        %v734 = vpop.permute.xlu0 %733
        %735 = vrot.lane.b32.xlu0 %v662, 6
        %v736 = vpop.permute.xlu0 %735
        %737 = vrot.lane.b32.xlu0 %v665, 6
        %v738 = vpop.permute.xlu0 %737
        %739 = vrot.lane.b32.xlu0 %v667, 6
        %v740 = vpop.permute.xlu0 %739
        %741 = vrot.lane.b32.xlu0 %v670, 6
        %v742 = vpop.permute.xlu0 %741
        %743 = vrot.lane.b32.xlu0 %v672, 6
        %v744 = vpop.permute.xlu0 %743
        %745 = vrot.lane.b32.xlu0 %v675, 6
        %v746 = vpop.permute.xlu0 %745
        %747 = vrot.lane.b32.xlu0 %v677, 6
        %v748 = vpop.permute.xlu0 %747
        %749 = vrot.lane.b32.xlu0 %v680, 6
        %v750 = vpop.permute.xlu0 %749
        %751 = vrot.lane.b32.xlu0 %v682, 6
        %v752 = vpop.permute.xlu0 %751
        %753 = vrot.lane.b32.xlu0 %v685, 6
        %v754 = vpop.permute.xlu0 %753
        %755 = vrot.lane.b32.xlu0 %v687, 6
        %v756 = vpop.permute.xlu0 %755
        %757 = vrot.lane.b32.xlu0 %v690, 6
        %v758 = vpop.permute.xlu0 %757
        %759 = vrot.lane.b32.xlu0 %v692, 6
        %v760 = vpop.permute.xlu0 %759
        %761 = vrot.lane.b32.xlu0 %v695, 6
        %v762 = vpop.permute.xlu0 %761
        %763 = vrot.lane.b32.xlu0 %v697, 6
        %v764 = vpop.permute.xlu0 %763
        %765 = vrot.lane.b32.xlu0 %v700, 6
        %v766 = vpop.permute.xlu0 %765
        %767 = vrot.lane.b32.xlu0 %v702, 6
        %v768 = vpop.permute.xlu0 %767
        %769 = vrot.lane.b32.xlu0 %v705, 6
        %v770 = vpop.permute.xlu0 %769
        %771 = vrot.lane.b32.xlu0 %v707, 6
        %v772 = vpop.permute.xlu0 %771
        %773 = vrot.lane.b32.xlu0 %v710, 6
        %v774 = vpop.permute.xlu0 %773
        %775 = vrot.lane.b32.xlu0 %v712, 6
        %v776 = vpop.permute.xlu0 %775
        %810 = vrot.lane.b32.xlu0 %v390, 9
        %v811 = vpop.permute.xlu0 %810
        %812 = vrot.lane.b32.xlu0 %v294, 9
        %v813 = vpop.permute.xlu0 %812
        %814 = vrot.lane.b32.xlu0 %v391, 9
        %v815 = vpop.permute.xlu0 %814
        %816 = vrot.lane.b32.xlu0 %v297, 9
        %v817 = vpop.permute.xlu0 %816
        %818 = vrot.lane.b32.xlu0 %v392, 9
        %v819 = vpop.permute.xlu0 %818
        %820 = vrot.lane.b32.xlu0 %v300, 9
        %v821 = vpop.permute.xlu0 %820
        %822 = vrot.lane.b32.xlu0 %v393, 9
        %v823 = vpop.permute.xlu0 %822
        %824 = vrot.lane.b32.xlu0 %v303, 9
        %v825 = vpop.permute.xlu0 %824
        %826 = vrot.lane.b32.xlu0 %v394, 9
        %v827 = vpop.permute.xlu0 %826
        %828 = vrot.lane.b32.xlu0 %v306, 9
        %v829 = vpop.permute.xlu0 %828
        %830 = vrot.lane.b32.xlu0 %v395, 9
        %v831 = vpop.permute.xlu0 %830
        %832 = vrot.lane.b32.xlu0 %v309, 9
        %v833 = vpop.permute.xlu0 %832
        %834 = vrot.lane.b32.xlu0 %v396, 9
        %v835 = vpop.permute.xlu0 %834
        %836 = vrot.lane.b32.xlu0 %v312, 9
        %v837 = vpop.permute.xlu0 %836
        %838 = vrot.lane.b32.xlu0 %v397, 9
        %v839 = vpop.permute.xlu0 %838
        %840 = vrot.lane.b32.xlu0 %v315, 9
        %v841 = vpop.permute.xlu0 %840
        %842 = vrot.lane.b32.xlu0 %v398, 9
        %v843 = vpop.permute.xlu0 %842
        %844 = vrot.lane.b32.xlu0 %v318, 9
        %v845 = vpop.permute.xlu0 %844
        %846 = vrot.lane.b32.xlu0 %v399, 9
        %v847 = vpop.permute.xlu0 %846
        %848 = vrot.lane.b32.xlu0 %v321, 9
        %v849 = vpop.permute.xlu0 %848
        %850 = vrot.lane.b32.xlu0 %v400, 9
        %v851 = vpop.permute.xlu0 %850
        %852 = vrot.lane.b32.xlu0 %v324, 9
        %v853 = vpop.permute.xlu0 %852
        %854 = vrot.lane.b32.xlu0 %v401, 9
        %v855 = vpop.permute.xlu0 %854
        %856 = vrot.lane.b32.xlu0 %v327, 9
        %v857 = vpop.permute.xlu0 %856
        %858 = vrot.lane.b32.xlu0 %v402, 9
        %v859 = vpop.permute.xlu0 %858
        %860 = vrot.lane.b32.xlu0 %v330, 9
        %v861 = vpop.permute.xlu0 %860
        %862 = vrot.lane.b32.xlu0 %v403, 9
        %v863 = vpop.permute.xlu0 %862
        %864 = vrot.lane.b32.xlu0 %v333, 9
        %v865 = vpop.permute.xlu0 %864
        %866 = vrot.lane.b32.xlu0 %v404, 9
        %v867 = vpop.permute.xlu0 %866
        %868 = vrot.lane.b32.xlu0 %v336, 9
        %v869 = vpop.permute.xlu0 %868
        %870 = vrot.lane.b32.xlu0 %v405, 9
        %v871 = vpop.permute.xlu0 %870
        %872 = vrot.lane.b32.xlu0 %v339, 9
        %v873 = vpop.permute.xlu0 %872
        %v907 = vrot.slane %v405, 1
        %v908 = vrot.slane %v339, 1
        %v909 = vsel %vm455, %v907, %v908
        %v910 = vrot.slane %v422, 1
        %v911 = vsel %vm455, %v908, %v910
        %912 = vrot.lane.b32.xlu0 %v463, 12
        %v913 = vpop.permute.xlu0 %912
        %914 = vrot.lane.b32.xlu0 %v465, 12
        %v915 = vpop.permute.xlu0 %914
        %916 = vrot.lane.b32.xlu0 %v468, 12
        %v917 = vpop.permute.xlu0 %916
        %918 = vrot.lane.b32.xlu0 %v470, 12
        %v919 = vpop.permute.xlu0 %918
        %920 = vrot.lane.b32.xlu0 %v473, 12
        %v921 = vpop.permute.xlu0 %920
        %922 = vrot.lane.b32.xlu0 %v475, 12
        %v923 = vpop.permute.xlu0 %922
        %924 = vrot.lane.b32.xlu0 %v478, 12
        %v925 = vpop.permute.xlu0 %924
        %926 = vrot.lane.b32.xlu0 %v480, 12
        %v927 = vpop.permute.xlu0 %926
        %928 = vrot.lane.b32.xlu0 %v483, 12
        %v929 = vpop.permute.xlu0 %928
        %930 = vrot.lane.b32.xlu0 %v485, 12
        %v931 = vpop.permute.xlu0 %930
        %932 = vrot.lane.b32.xlu0 %v488, 12
        %v933 = vpop.permute.xlu0 %932
        %934 = vrot.lane.b32.xlu0 %v490, 12
        %v935 = vpop.permute.xlu0 %934
        %936 = vrot.lane.b32.xlu0 %v493, 12
        %v937 = vpop.permute.xlu0 %936
        %938 = vrot.lane.b32.xlu0 %v495, 12
        %v939 = vpop.permute.xlu0 %938
        %940 = vrot.lane.b32.xlu0 %v498, 12
        %v941 = vpop.permute.xlu0 %940
        %942 = vrot.lane.b32.xlu0 %v500, 12
        %v943 = vpop.permute.xlu0 %942
        %944 = vrot.lane.b32.xlu0 %v503, 12
        %v945 = vpop.permute.xlu0 %944
        %946 = vrot.lane.b32.xlu0 %v505, 12
        %v947 = vpop.permute.xlu0 %946
        %948 = vrot.lane.b32.xlu0 %v508, 12
        %v949 = vpop.permute.xlu0 %948
        %950 = vrot.lane.b32.xlu0 %v510, 12
        %v951 = vpop.permute.xlu0 %950
        %952 = vrot.lane.b32.xlu0 %v513, 12
        %v953 = vpop.permute.xlu0 %952
        %954 = vrot.lane.b32.xlu0 %v515, 12
        %v955 = vpop.permute.xlu0 %954
        %956 = vrot.lane.b32.xlu0 %v518, 12
        %v957 = vpop.permute.xlu0 %956
        %958 = vrot.lane.b32.xlu0 %v520, 12
        %v959 = vpop.permute.xlu0 %958
        %960 = vrot.lane.b32.xlu0 %v523, 12
        %v961 = vpop.permute.xlu0 %960
        %962 = vrot.lane.b32.xlu0 %v525, 12
        %v963 = vpop.permute.xlu0 %962
        %964 = vrot.lane.b32.xlu0 %v528, 12
        %v965 = vpop.permute.xlu0 %964
        %966 = vrot.lane.b32.xlu0 %v530, 12
        %v967 = vpop.permute.xlu0 %966
        %968 = vrot.lane.b32.xlu0 %v533, 12
        %v969 = vpop.permute.xlu0 %968
        %970 = vrot.lane.b32.xlu0 %v535, 12
        %v971 = vpop.permute.xlu0 %970
        %972 = vrot.lane.b32.xlu0 %v909, 12
        %v973 = vpop.permute.xlu0 %972
        %974 = vrot.lane.b32.xlu0 %v911, 12
        %v975 = vpop.permute.xlu0 %974
        %v1008 = vrot.slane %v405, 2
        %v1009 = vrot.slane %v339, 2
        %v1010 = vsel %vm632, %v1008, %v1009
        %v1011 = vrot.slane %v422, 2
        %v1012 = vsel %vm632, %v1009, %v1011
        %1013 = vrot.lane.b32.xlu0 %v640, 15
        %v1014 = vpop.permute.xlu0 %1013
        %1015 = vrot.lane.b32.xlu0 %v642, 15
        %v1016 = vpop.permute.xlu0 %1015
        %1017 = vrot.lane.b32.xlu0 %v645, 15
        %v1018 = vpop.permute.xlu0 %1017
        %1019 = vrot.lane.b32.xlu0 %v647, 15
        %v1020 = vpop.permute.xlu0 %1019
        %1021 = vrot.lane.b32.xlu0 %v650, 15
        %v1022 = vpop.permute.xlu0 %1021
        %1023 = vrot.lane.b32.xlu0 %v652, 15
        %v1024 = vpop.permute.xlu0 %1023
        %1025 = vrot.lane.b32.xlu0 %v655, 15
        %v1026 = vpop.permute.xlu0 %1025
        %1027 = vrot.lane.b32.xlu0 %v657, 15
        %v1028 = vpop.permute.xlu0 %1027
        %1029 = vrot.lane.b32.xlu0 %v660, 15
        %v1030 = vpop.permute.xlu0 %1029
        %1031 = vrot.lane.b32.xlu0 %v662, 15
        %v1032 = vpop.permute.xlu0 %1031
        %1033 = vrot.lane.b32.xlu0 %v665, 15
        %v1034 = vpop.permute.xlu0 %1033
        %1035 = vrot.lane.b32.xlu0 %v667, 15
        %v1036 = vpop.permute.xlu0 %1035
        %1037 = vrot.lane.b32.xlu0 %v670, 15
        %v1038 = vpop.permute.xlu0 %1037
        %1039 = vrot.lane.b32.xlu0 %v672, 15
        %v1040 = vpop.permute.xlu0 %1039
        %1041 = vrot.lane.b32.xlu0 %v675, 15
        %v1042 = vpop.permute.xlu0 %1041
        %1043 = vrot.lane.b32.xlu0 %v677, 15
        %v1044 = vpop.permute.xlu0 %1043
        %1045 = vrot.lane.b32.xlu0 %v680, 15
        %v1046 = vpop.permute.xlu0 %1045
        %1047 = vrot.lane.b32.xlu0 %v682, 15
        %v1048 = vpop.permute.xlu0 %1047
        %1049 = vrot.lane.b32.xlu0 %v685, 15
        %v1050 = vpop.permute.xlu0 %1049
        %1051 = vrot.lane.b32.xlu0 %v687, 15
        %v1052 = vpop.permute.xlu0 %1051
        %1053 = vrot.lane.b32.xlu0 %v690, 15
        %v1054 = vpop.permute.xlu0 %1053
        %1055 = vrot.lane.b32.xlu0 %v692, 15
        %v1056 = vpop.permute.xlu0 %1055
        %1057 = vrot.lane.b32.xlu0 %v695, 15
        %v1058 = vpop.permute.xlu0 %1057
        %1059 = vrot.lane.b32.xlu0 %v697, 15
        %v1060 = vpop.permute.xlu0 %1059
        %1061 = vrot.lane.b32.xlu0 %v700, 15
        %v1062 = vpop.permute.xlu0 %1061
        %1063 = vrot.lane.b32.xlu0 %v702, 15
        %v1064 = vpop.permute.xlu0 %1063
        %1065 = vrot.lane.b32.xlu0 %v705, 15
        %v1066 = vpop.permute.xlu0 %1065
        %1067 = vrot.lane.b32.xlu0 %v707, 15
        %v1068 = vpop.permute.xlu0 %1067
        %1069 = vrot.lane.b32.xlu0 %v710, 15
        %v1070 = vpop.permute.xlu0 %1069
        %1071 = vrot.lane.b32.xlu0 %v712, 15
        %v1072 = vpop.permute.xlu0 %1071
        %1073 = vrot.lane.b32.xlu0 %v1010, 15
        %v1074 = vpop.permute.xlu0 %1073
        %1075 = vrot.lane.b32.xlu0 %v1012, 15
        %v1076 = vpop.permute.xlu0 %1075
        %1109 = vrot.lane.b32.xlu0 %v391, 18
        %v1110 = vpop.permute.xlu0 %1109
        %1111 = vrot.lane.b32.xlu0 %v297, 18
        %v1112 = vpop.permute.xlu0 %1111
        %1113 = vrot.lane.b32.xlu0 %v392, 18
        %v1114 = vpop.permute.xlu0 %1113
        %1115 = vrot.lane.b32.xlu0 %v300, 18
        %v1116 = vpop.permute.xlu0 %1115
        %1117 = vrot.lane.b32.xlu0 %v393, 18
        %v1118 = vpop.permute.xlu0 %1117
        %1119 = vrot.lane.b32.xlu0 %v303, 18
        %v1120 = vpop.permute.xlu0 %1119
        %1121 = vrot.lane.b32.xlu0 %v394, 18
        %v1122 = vpop.permute.xlu0 %1121
        %1123 = vrot.lane.b32.xlu0 %v306, 18
        %v1124 = vpop.permute.xlu0 %1123
        %1125 = vrot.lane.b32.xlu0 %v395, 18
        %v1126 = vpop.permute.xlu0 %1125
        %1127 = vrot.lane.b32.xlu0 %v309, 18
        %v1128 = vpop.permute.xlu0 %1127
        %1129 = vrot.lane.b32.xlu0 %v396, 18
        %v1130 = vpop.permute.xlu0 %1129
        %1131 = vrot.lane.b32.xlu0 %v312, 18
        %v1132 = vpop.permute.xlu0 %1131
        %1133 = vrot.lane.b32.xlu0 %v397, 18
        %v1134 = vpop.permute.xlu0 %1133
        %1135 = vrot.lane.b32.xlu0 %v315, 18
        %v1136 = vpop.permute.xlu0 %1135
        %1137 = vrot.lane.b32.xlu0 %v398, 18
        %v1138 = vpop.permute.xlu0 %1137
        %1139 = vrot.lane.b32.xlu0 %v318, 18
        %v1140 = vpop.permute.xlu0 %1139
        %1141 = vrot.lane.b32.xlu0 %v399, 18
        %v1142 = vpop.permute.xlu0 %1141
        %1143 = vrot.lane.b32.xlu0 %v321, 18
        %v1144 = vpop.permute.xlu0 %1143
        %1145 = vrot.lane.b32.xlu0 %v400, 18
        %v1146 = vpop.permute.xlu0 %1145
        %1147 = vrot.lane.b32.xlu0 %v324, 18
        %v1148 = vpop.permute.xlu0 %1147
        %1149 = vrot.lane.b32.xlu0 %v401, 18
        %v1150 = vpop.permute.xlu0 %1149
        %1151 = vrot.lane.b32.xlu0 %v327, 18
        %v1152 = vpop.permute.xlu0 %1151
        %1153 = vrot.lane.b32.xlu0 %v402, 18
        %v1154 = vpop.permute.xlu0 %1153
        %1155 = vrot.lane.b32.xlu0 %v330, 18
        %v1156 = vpop.permute.xlu0 %1155
        %1157 = vrot.lane.b32.xlu0 %v403, 18
        %v1158 = vpop.permute.xlu0 %1157
        %1159 = vrot.lane.b32.xlu0 %v333, 18
        %v1160 = vpop.permute.xlu0 %1159
        %1161 = vrot.lane.b32.xlu0 %v404, 18
        %v1162 = vpop.permute.xlu0 %1161
        %1163 = vrot.lane.b32.xlu0 %v336, 18
        %v1164 = vpop.permute.xlu0 %1163
        %1165 = vrot.lane.b32.xlu0 %v405, 18
        %v1166 = vpop.permute.xlu0 %1165
        %1167 = vrot.lane.b32.xlu0 %v339, 18
        %v1168 = vpop.permute.xlu0 %1167
        %1169 = vrot.lane.b32.xlu0 %v389, 18
        %v1170 = vpop.permute.xlu0 %1169
        %1171 = vrot.lane.b32.xlu0 %v291, 18
        %v1172 = vpop.permute.xlu0 %1171
        %1205 = vrot.lane.b32.xlu0 %v468, 21
        %v1206 = vpop.permute.xlu0 %1205
        %1207 = vrot.lane.b32.xlu0 %v470, 21
        %v1208 = vpop.permute.xlu0 %1207
        %1209 = vrot.lane.b32.xlu0 %v473, 21
        %v1210 = vpop.permute.xlu0 %1209
        %1211 = vrot.lane.b32.xlu0 %v475, 21
        %v1212 = vpop.permute.xlu0 %1211
        %1213 = vrot.lane.b32.xlu0 %v478, 21
        %v1214 = vpop.permute.xlu0 %1213
        %1215 = vrot.lane.b32.xlu0 %v480, 21
        %v1216 = vpop.permute.xlu0 %1215
        %1217 = vrot.lane.b32.xlu0 %v483, 21
        %v1218 = vpop.permute.xlu0 %1217
        %1219 = vrot.lane.b32.xlu0 %v485, 21
        %v1220 = vpop.permute.xlu0 %1219
        %1221 = vrot.lane.b32.xlu0 %v488, 21
        %v1222 = vpop.permute.xlu0 %1221
        %1223 = vrot.lane.b32.xlu0 %v490, 21
        %v1224 = vpop.permute.xlu0 %1223
        %1225 = vrot.lane.b32.xlu0 %v493, 21
        %v1226 = vpop.permute.xlu0 %1225
        %1227 = vrot.lane.b32.xlu0 %v495, 21
        %v1228 = vpop.permute.xlu0 %1227
        %1229 = vrot.lane.b32.xlu0 %v498, 21
        %v1230 = vpop.permute.xlu0 %1229
        %1231 = vrot.lane.b32.xlu0 %v500, 21
        %v1232 = vpop.permute.xlu0 %1231
        %1233 = vrot.lane.b32.xlu0 %v503, 21
        %v1234 = vpop.permute.xlu0 %1233
        %1235 = vrot.lane.b32.xlu0 %v505, 21
        %v1236 = vpop.permute.xlu0 %1235
        %1237 = vrot.lane.b32.xlu0 %v508, 21
        %v1238 = vpop.permute.xlu0 %1237
        %1239 = vrot.lane.b32.xlu0 %v510, 21
        %v1240 = vpop.permute.xlu0 %1239
        %1241 = vrot.lane.b32.xlu0 %v513, 21
        %v1242 = vpop.permute.xlu0 %1241
        %1243 = vrot.lane.b32.xlu0 %v515, 21
        %v1244 = vpop.permute.xlu0 %1243
        %1245 = vrot.lane.b32.xlu0 %v518, 21
        %v1246 = vpop.permute.xlu0 %1245
        %1247 = vrot.lane.b32.xlu0 %v520, 21
        %v1248 = vpop.permute.xlu0 %1247
        %1249 = vrot.lane.b32.xlu0 %v523, 21
        %v1250 = vpop.permute.xlu0 %1249
        %1251 = vrot.lane.b32.xlu0 %v525, 21
        %v1252 = vpop.permute.xlu0 %1251
        %1253 = vrot.lane.b32.xlu0 %v528, 21
        %v1254 = vpop.permute.xlu0 %1253
        %1255 = vrot.lane.b32.xlu0 %v530, 21
        %v1256 = vpop.permute.xlu0 %1255
        %1257 = vrot.lane.b32.xlu0 %v533, 21
        %v1258 = vpop.permute.xlu0 %1257
        %1259 = vrot.lane.b32.xlu0 %v535, 21
        %v1260 = vpop.permute.xlu0 %1259
        %1261 = vrot.lane.b32.xlu0 %v909, 21
        %v1262 = vpop.permute.xlu0 %1261
        %1263 = vrot.lane.b32.xlu0 %v911, 21
        %v1264 = vpop.permute.xlu0 %1263
        %1265 = vrot.lane.b32.xlu0 %v458, 21
        %v1266 = vpop.permute.xlu0 %1265
        %1267 = vrot.lane.b32.xlu0 %v460, 21
        %v1268 = vpop.permute.xlu0 %1267
        %1301 = vrot.lane.b32.xlu0 %v645, 24
        %v1302 = vpop.permute.xlu0 %1301
        %1303 = vrot.lane.b32.xlu0 %v647, 24
        %v1304 = vpop.permute.xlu0 %1303
        %1305 = vrot.lane.b32.xlu0 %v650, 24
        %v1306 = vpop.permute.xlu0 %1305
        %1307 = vrot.lane.b32.xlu0 %v652, 24
        %v1308 = vpop.permute.xlu0 %1307
        %1309 = vrot.lane.b32.xlu0 %v655, 24
        %v1310 = vpop.permute.xlu0 %1309
        %1311 = vrot.lane.b32.xlu0 %v657, 24
        %v1312 = vpop.permute.xlu0 %1311
        %1313 = vrot.lane.b32.xlu0 %v660, 24
        %v1314 = vpop.permute.xlu0 %1313
        %1315 = vrot.lane.b32.xlu0 %v662, 24
        %v1316 = vpop.permute.xlu0 %1315
        %1317 = vrot.lane.b32.xlu0 %v665, 24
        %v1318 = vpop.permute.xlu0 %1317
        %1319 = vrot.lane.b32.xlu0 %v667, 24
        %v1320 = vpop.permute.xlu0 %1319
        %1321 = vrot.lane.b32.xlu0 %v670, 24
        %v1322 = vpop.permute.xlu0 %1321
        %1323 = vrot.lane.b32.xlu0 %v672, 24
        %v1324 = vpop.permute.xlu0 %1323
        %1325 = vrot.lane.b32.xlu0 %v675, 24
        %v1326 = vpop.permute.xlu0 %1325
        %1327 = vrot.lane.b32.xlu0 %v677, 24
        %v1328 = vpop.permute.xlu0 %1327
        %1329 = vrot.lane.b32.xlu0 %v680, 24
        %v1330 = vpop.permute.xlu0 %1329
        %1331 = vrot.lane.b32.xlu0 %v682, 24
        %v1332 = vpop.permute.xlu0 %1331
        %1333 = vrot.lane.b32.xlu0 %v685, 24
        %v1334 = vpop.permute.xlu0 %1333
        %1335 = vrot.lane.b32.xlu0 %v687, 24
        %v1336 = vpop.permute.xlu0 %1335
        %1337 = vrot.lane.b32.xlu0 %v690, 24
        %v1338 = vpop.permute.xlu0 %1337
        %1339 = vrot.lane.b32.xlu0 %v692, 24
        %v1340 = vpop.permute.xlu0 %1339
        %1341 = vrot.lane.b32.xlu0 %v695, 24
        %v1342 = vpop.permute.xlu0 %1341
        %1343 = vrot.lane.b32.xlu0 %v697, 24
        %v1344 = vpop.permute.xlu0 %1343
        %1345 = vrot.lane.b32.xlu0 %v700, 24
        %v1346 = vpop.permute.xlu0 %1345
        %1347 = vrot.lane.b32.xlu0 %v702, 24
        %v1348 = vpop.permute.xlu0 %1347
        %1349 = vrot.lane.b32.xlu0 %v705, 24
        %v1350 = vpop.permute.xlu0 %1349
        %1351 = vrot.lane.b32.xlu0 %v707, 24
        %v1352 = vpop.permute.xlu0 %1351
        %1353 = vrot.lane.b32.xlu0 %v710, 24
        %v1354 = vpop.permute.xlu0 %1353
        %1355 = vrot.lane.b32.xlu0 %v712, 24
        %v1356 = vpop.permute.xlu0 %1355
        %1357 = vrot.lane.b32.xlu0 %v1010, 24
        %v1358 = vpop.permute.xlu0 %1357
        %1359 = vrot.lane.b32.xlu0 %v1012, 24
        %v1360 = vpop.permute.xlu0 %1359
        %1361 = vrot.lane.b32.xlu0 %v635, 24
        %v1362 = vpop.permute.xlu0 %1361
        %1363 = vrot.lane.b32.xlu0 %v637, 24
        %v1364 = vpop.permute.xlu0 %1363
        %vm1397 = vcmask 23552
        %v1398 = vsel %vm1397, %v389, %v537
        %v1399 = vsel %vm1397, %v291, %v539
        %v1400 = vsel %vm1397, %v390, %v541
        %v1401 = vsel %vm1397, %v294, %v543
        %v1402 = vsel %vm1397, %v391, %v545
        %v1403 = vsel %vm1397, %v297, %v547
        %v1404 = vsel %vm1397, %v392, %v549
        %v1405 = vsel %vm1397, %v300, %v551
        %v1406 = vsel %vm1397, %v393, %v553
        %v1407 = vsel %vm1397, %v303, %v555
        %v1408 = vsel %vm1397, %v394, %v557
        %v1409 = vsel %vm1397, %v306, %v559
        %v1410 = vsel %vm1397, %v395, %v561
        %v1411 = vsel %vm1397, %v309, %v563
        %v1412 = vsel %vm1397, %v396, %v565
        %v1413 = vsel %vm1397, %v312, %v567
        %v1414 = vsel %vm1397, %v397, %v569
        %v1415 = vsel %vm1397, %v315, %v571
        %v1416 = vsel %vm1397, %v398, %v573
        %v1417 = vsel %vm1397, %v318, %v575
        %v1418 = vsel %vm1397, %v399, %v577
        %v1419 = vsel %vm1397, %v321, %v579
        %v1420 = vsel %vm1397, %v400, %v581
        %v1421 = vsel %vm1397, %v324, %v583
        %v1422 = vsel %vm1397, %v401, %v585
        %v1423 = vsel %vm1397, %v327, %v587
        %v1424 = vsel %vm1397, %v402, %v589
        %v1425 = vsel %vm1397, %v330, %v591
        %v1426 = vsel %vm1397, %v403, %v593
        %v1427 = vsel %vm1397, %v333, %v595
        %v1428 = vsel %vm1397, %v404, %v597
        %v1429 = vsel %vm1397, %v336, %v599
        %vm1430 = vcmask 48128
        %v1431 = vsel %vm1430, %v1398, %v714
        %v1432 = vsel %vm1430, %v1399, %v716
        %v1433 = vsel %vm1430, %v1400, %v718
        %v1434 = vsel %vm1430, %v1401, %v720
        %v1435 = vsel %vm1430, %v1402, %v722
        %v1436 = vsel %vm1430, %v1403, %v724
        %v1437 = vsel %vm1430, %v1404, %v726
        %v1438 = vsel %vm1430, %v1405, %v728
        %v1439 = vsel %vm1430, %v1406, %v730
        %v1440 = vsel %vm1430, %v1407, %v732
        %v1441 = vsel %vm1430, %v1408, %v734
        %v1442 = vsel %vm1430, %v1409, %v736
        %v1443 = vsel %vm1430, %v1410, %v738
        %v1444 = vsel %vm1430, %v1411, %v740
        %v1445 = vsel %vm1430, %v1412, %v742
        %v1446 = vsel %vm1430, %v1413, %v744
        %v1447 = vsel %vm1430, %v1414, %v746
        %v1448 = vsel %vm1430, %v1415, %v748
        %v1449 = vsel %vm1430, %v1416, %v750
        %v1450 = vsel %vm1430, %v1417, %v752
        %v1451 = vsel %vm1430, %v1418, %v754
        %v1452 = vsel %vm1430, %v1419, %v756
        %v1453 = vsel %vm1430, %v1420, %v758
        %v1454 = vsel %vm1430, %v1421, %v760
        %v1455 = vsel %vm1430, %v1422, %v762
        %v1456 = vsel %vm1430, %v1423, %v764
        %v1457 = vsel %vm1430, %v1424, %v766
        %v1458 = vsel %vm1430, %v1425, %v768
        %v1459 = vsel %vm1430, %v1426, %v770
        %v1460 = vsel %vm1430, %v1427, %v772
        %v1461 = vsel %vm1430, %v1428, %v774
        %v1462 = vsel %vm1430, %v1429, %v776
        %vm1463 = vcmask 72704
        %v1464 = vsel %vm1463, %v1431, %v811
        %v1465 = vsel %vm1463, %v1432, %v813
        %v1466 = vsel %vm1463, %v1433, %v815
        %v1467 = vsel %vm1463, %v1434, %v817
        %v1468 = vsel %vm1463, %v1435, %v819
        %v1469 = vsel %vm1463, %v1436, %v821
        %v1470 = vsel %vm1463, %v1437, %v823
        %v1471 = vsel %vm1463, %v1438, %v825
        %v1472 = vsel %vm1463, %v1439, %v827
        %v1473 = vsel %vm1463, %v1440, %v829
        %v1474 = vsel %vm1463, %v1441, %v831
        %v1475 = vsel %vm1463, %v1442, %v833
        %v1476 = vsel %vm1463, %v1443, %v835
        %v1477 = vsel %vm1463, %v1444, %v837
        %v1478 = vsel %vm1463, %v1445, %v839
        %v1479 = vsel %vm1463, %v1446, %v841
        %v1480 = vsel %vm1463, %v1447, %v843
        %v1481 = vsel %vm1463, %v1448, %v845
        %v1482 = vsel %vm1463, %v1449, %v847
        %v1483 = vsel %vm1463, %v1450, %v849
        %v1484 = vsel %vm1463, %v1451, %v851
        %v1485 = vsel %vm1463, %v1452, %v853
        %v1486 = vsel %vm1463, %v1453, %v855
        %v1487 = vsel %vm1463, %v1454, %v857
        %v1488 = vsel %vm1463, %v1455, %v859
        %v1489 = vsel %vm1463, %v1456, %v861
        %v1490 = vsel %vm1463, %v1457, %v863
        %v1491 = vsel %vm1463, %v1458, %v865
        %v1492 = vsel %vm1463, %v1459, %v867
        %v1493 = vsel %vm1463, %v1460, %v869
        %v1494 = vsel %vm1463, %v1461, %v871
        %v1495 = vsel %vm1463, %v1462, %v873
        %vm1496 = vcmask 97280
        %v1497 = vsel %vm1496, %v1464, %v913
        %v1498 = vsel %vm1496, %v1465, %v915
        %v1499 = vsel %vm1496, %v1466, %v917
        %v1500 = vsel %vm1496, %v1467, %v919
        %v1501 = vsel %vm1496, %v1468, %v921
        %v1502 = vsel %vm1496, %v1469, %v923
        %v1503 = vsel %vm1496, %v1470, %v925
        %v1504 = vsel %vm1496, %v1471, %v927
        %v1505 = vsel %vm1496, %v1472, %v929
        %v1506 = vsel %vm1496, %v1473, %v931
        %v1507 = vsel %vm1496, %v1474, %v933
        %v1508 = vsel %vm1496, %v1475, %v935
        %v1509 = vsel %vm1496, %v1476, %v937
        %v1510 = vsel %vm1496, %v1477, %v939
        %v1511 = vsel %vm1496, %v1478, %v941
        %v1512 = vsel %vm1496, %v1479, %v943
        %v1513 = vsel %vm1496, %v1480, %v945
        %v1514 = vsel %vm1496, %v1481, %v947
        %v1515 = vsel %vm1496, %v1482, %v949
        %v1516 = vsel %vm1496, %v1483, %v951
        %v1517 = vsel %vm1496, %v1484, %v953
        %v1518 = vsel %vm1496, %v1485, %v955
        %v1519 = vsel %vm1496, %v1486, %v957
        %v1520 = vsel %vm1496, %v1487, %v959
        %v1521 = vsel %vm1496, %v1488, %v961
        %v1522 = vsel %vm1496, %v1489, %v963
        %v1523 = vsel %vm1496, %v1490, %v965
        %v1524 = vsel %vm1496, %v1491, %v967
        %v1525 = vsel %vm1496, %v1492, %v969
        %v1526 = vsel %vm1496, %v1493, %v971
        %v1527 = vsel %vm1496, %v1494, %v973
        %v1528 = vsel %vm1496, %v1495, %v975
        %vm1529 = vcmask 121856
        %v1530 = vsel %vm1529, %v1497, %v1014
        %v1531 = vsel %vm1529, %v1498, %v1016
        %v1532 = vsel %vm1529, %v1499, %v1018
        %v1533 = vsel %vm1529, %v1500, %v1020
        %v1534 = vsel %vm1529, %v1501, %v1022
        %v1535 = vsel %vm1529, %v1502, %v1024
        %v1536 = vsel %vm1529, %v1503, %v1026
        %v1537 = vsel %vm1529, %v1504, %v1028
        %v1538 = vsel %vm1529, %v1505, %v1030
        %v1539 = vsel %vm1529, %v1506, %v1032
        %v1540 = vsel %vm1529, %v1507, %v1034
        %v1541 = vsel %vm1529, %v1508, %v1036
        %v1542 = vsel %vm1529, %v1509, %v1038
        %v1543 = vsel %vm1529, %v1510, %v1040
        %v1544 = vsel %vm1529, %v1511, %v1042
        %v1545 = vsel %vm1529, %v1512, %v1044
        %v1546 = vsel %vm1529, %v1513, %v1046
        %v1547 = vsel %vm1529, %v1514, %v1048
        %v1548 = vsel %vm1529, %v1515, %v1050
        %v1549 = vsel %vm1529, %v1516, %v1052
        %v1550 = vsel %vm1529, %v1517, %v1054
        %v1551 = vsel %vm1529, %v1518, %v1056
        %v1552 = vsel %vm1529, %v1519, %v1058
        %v1553 = vsel %vm1529, %v1520, %v1060
        %v1554 = vsel %vm1529, %v1521, %v1062
        %v1555 = vsel %vm1529, %v1522, %v1064
        %v1556 = vsel %vm1529, %v1523, %v1066
        %v1557 = vsel %vm1529, %v1524, %v1068
        %v1558 = vsel %vm1529, %v1525, %v1070
        %v1559 = vsel %vm1529, %v1526, %v1072
        %v1560 = vsel %vm1529, %v1527, %v1074
        %v1561 = vsel %vm1529, %v1528, %v1076
        %vm1562 = vcmask 146432
        %v1563 = vsel %vm1562, %v1530, %v1110
        %v1564 = vsel %vm1562, %v1531, %v1112
        %v1565 = vsel %vm1562, %v1532, %v1114
        %v1566 = vsel %vm1562, %v1533, %v1116
        %v1567 = vsel %vm1562, %v1534, %v1118
        %v1568 = vsel %vm1562, %v1535, %v1120
        %v1569 = vsel %vm1562, %v1536, %v1122
        %v1570 = vsel %vm1562, %v1537, %v1124
        %v1571 = vsel %vm1562, %v1538, %v1126
        %v1572 = vsel %vm1562, %v1539, %v1128
        %v1573 = vsel %vm1562, %v1540, %v1130
        %v1574 = vsel %vm1562, %v1541, %v1132
        %v1575 = vsel %vm1562, %v1542, %v1134
        %v1576 = vsel %vm1562, %v1543, %v1136
        %v1577 = vsel %vm1562, %v1544, %v1138
        %v1578 = vsel %vm1562, %v1545, %v1140
        %v1579 = vsel %vm1562, %v1546, %v1142
        %v1580 = vsel %vm1562, %v1547, %v1144
        %v1581 = vsel %vm1562, %v1548, %v1146
        %v1582 = vsel %vm1562, %v1549, %v1148
        %v1583 = vsel %vm1562, %v1550, %v1150
        %v1584 = vsel %vm1562, %v1551, %v1152
        %v1585 = vsel %vm1562, %v1552, %v1154
        %v1586 = vsel %vm1562, %v1553, %v1156
        %v1587 = vsel %vm1562, %v1554, %v1158
        %v1588 = vsel %vm1562, %v1555, %v1160
        %v1589 = vsel %vm1562, %v1556, %v1162
        %v1590 = vsel %vm1562, %v1557, %v1164
        %v1591 = vsel %vm1562, %v1558, %v1166
        %v1592 = vsel %vm1562, %v1559, %v1168
        %v1593 = vsel %vm1562, %v1560, %v1170
        %v1594 = vsel %vm1562, %v1561, %v1172
        %vm1595 = vcmask 171008
        %v1596 = vsel %vm1595, %v1563, %v1206
        %v1597 = vsel %vm1595, %v1564, %v1208
        %v1598 = vsel %vm1595, %v1565, %v1210
        %v1599 = vsel %vm1595, %v1566, %v1212
        %v1600 = vsel %vm1595, %v1567, %v1214
        %v1601 = vsel %vm1595, %v1568, %v1216
        %v1602 = vsel %vm1595, %v1569, %v1218
        %v1603 = vsel %vm1595, %v1570, %v1220
        %v1604 = vsel %vm1595, %v1571, %v1222
        %v1605 = vsel %vm1595, %v1572, %v1224
        %v1606 = vsel %vm1595, %v1573, %v1226
        %v1607 = vsel %vm1595, %v1574, %v1228
        %v1608 = vsel %vm1595, %v1575, %v1230
        %v1609 = vsel %vm1595, %v1576, %v1232
        %v1610 = vsel %vm1595, %v1577, %v1234
        %v1611 = vsel %vm1595, %v1578, %v1236
        %v1612 = vsel %vm1595, %v1579, %v1238
        %v1613 = vsel %vm1595, %v1580, %v1240
        %v1614 = vsel %vm1595, %v1581, %v1242
        %v1615 = vsel %vm1595, %v1582, %v1244
        %v1616 = vsel %vm1595, %v1583, %v1246
        %v1617 = vsel %vm1595, %v1584, %v1248
        %v1618 = vsel %vm1595, %v1585, %v1250
        %v1619 = vsel %vm1595, %v1586, %v1252
        %v1620 = vsel %vm1595, %v1587, %v1254
        %v1621 = vsel %vm1595, %v1588, %v1256
        %v1622 = vsel %vm1595, %v1589, %v1258
        %v1623 = vsel %vm1595, %v1590, %v1260
        %v1624 = vsel %vm1595, %v1591, %v1262
        %v1625 = vsel %vm1595, %v1592, %v1264
        %v1626 = vsel %vm1595, %v1593, %v1266
        %v1627 = vsel %vm1595, %v1594, %v1268
        %vm1628 = vcmask 195584
        %v1629 = vsel %vm1628, %v1596, %v1302
        %v1630 = vsel %vm1628, %v1597, %v1304
        %v1631 = vsel %vm1628, %v1598, %v1306
        %v1632 = vsel %vm1628, %v1599, %v1308
        %v1633 = vsel %vm1628, %v1600, %v1310
        %v1634 = vsel %vm1628, %v1601, %v1312
        %v1635 = vsel %vm1628, %v1602, %v1314
        %v1636 = vsel %vm1628, %v1603, %v1316
        %v1637 = vsel %vm1628, %v1604, %v1318
        %v1638 = vsel %vm1628, %v1605, %v1320
        %v1639 = vsel %vm1628, %v1606, %v1322
        %v1640 = vsel %vm1628, %v1607, %v1324
        %v1641 = vsel %vm1628, %v1608, %v1326
        %v1642 = vsel %vm1628, %v1609, %v1328
        %v1643 = vsel %vm1628, %v1610, %v1330
        %v1644 = vsel %vm1628, %v1611, %v1332
        %v1645 = vsel %vm1628, %v1612, %v1334
        %v1646 = vsel %vm1628, %v1613, %v1336
        %v1647 = vsel %vm1628, %v1614, %v1338
        %v1648 = vsel %vm1628, %v1615, %v1340
        %v1649 = vsel %vm1628, %v1616, %v1342
        %v1650 = vsel %vm1628, %v1617, %v1344
        %v1651 = vsel %vm1628, %v1618, %v1346
        %v1652 = vsel %vm1628, %v1619, %v1348
        %v1653 = vsel %vm1628, %v1620, %v1350
        %v1654 = vsel %vm1628, %v1621, %v1352
        %v1655 = vsel %vm1628, %v1622, %v1354
        %v1656 = vsel %vm1628, %v1623, %v1356
        %v1657 = vsel %vm1628, %v1624, %v1358
        %v1658 = vsel %vm1628, %v1625, %v1360
        %v1659 = vsel %vm1628, %v1626, %v1362
        %v1660 = vsel %vm1628, %v1627, %v1364
        %v1661 = vpack.c.bf16 %v1630, %v1629
        %v1662 = vpack.c.bf16 %v1632, %v1631
        %v1663 = vpack.c.bf16 %v1634, %v1633
        %v1664 = vpack.c.bf16 %v1636, %v1635
        %v1665 = vpack.c.bf16 %v1638, %v1637
        %v1666 = vpack.c.bf16 %v1640, %v1639
        %v1667 = vpack.c.bf16 %v1642, %v1641
        %v1668 = vpack.c.bf16 %v1644, %v1643
        %v1669 = vpack.c.bf16 %v1646, %v1645
        %v1670 = vpack.c.bf16 %v1648, %v1647
        %v1671 = vpack.c.bf16 %v1650, %v1649
        %v1672 = vpack.c.bf16 %v1652, %v1651
        %v1673 = vpack.c.bf16 %v1654, %v1653
        %v1674 = vpack.c.bf16 %v1656, %v1655
        %v1675 = vpack.c.bf16 %v1658, %v1657
        %v1676 = vpack.c.bf16 %v1660, %v1659
        %v1677 = vld [vmem:[%s1] sm:$0xf]
        %v1678 = vld [vmem:[%s1 + $0x4] sm:$0xf]
        %v1679 = vld [vmem:[%s1 + $0x8] sm:$0xf]
        %v1680 = vld [vmem:[%s1 + $0xc] sm:$0x3]
        %v1681 = vld [vmem:[%s2] sm:$0x1]
        %v1683 = vlaneseq
        %v1684 = vshrl.u32 %v1683, 7
        %v1685 = vsub.s32 0, %v1684
        %v1686 = vrot.slane %v1681, %v1685
        %v1692 = vunpack.c.l.b16 %v1677
        %v1693 = vunpack.c.l.b16 %v1678
        %v1694 = vunpack.c.l.b16 %v1679
        %v1695 = vunpack.c.l.b16 %v1680
        %v1696 = vpack.c.b16 %v1693, %v1692
        %v1697 = vpack.c.b16 %v1695, %v1694
        %vm1699 = vcmask 220160
        %v1701 = vsel %vm1699, %v1661, 0
        %v1704 = vsel %vm1699, %v1662, 0
        %v1707 = vsel %vm1699, %v1663, 0
        %v1710 = vsel %vm1699, %v1664, 0
        %v1713 = vsel %vm1699, %v1665, 0
        %v1716 = vsel %vm1699, %v1666, 0
        %v1719 = vsel %vm1699, %v1667, 0
        %v1722 = vsel %vm1699, %v1668, 0
        %v1725 = vsel %vm1699, %v1669, 0
        %v1728 = vsel %vm1699, %v1670, 0
        %v1731 = vsel %vm1699, %v1671, 0
        %v1734 = vsel %vm1699, %v1672, 0
        %v1737 = vsel %vm1699, %v1673, 0
        %v1740 = vsel %vm1699, %v1674, 0
        %v1743 = vsel %vm1699, %v1675, 0
        %v1746 = vsel %vm1699, %v1676, 0
        %vm1748 = vcmask 1044480
        %v1749 = vsel %vm1748, 4294967295, 65535
        %v1750 = vsel %vm632, %v1749, 0
        %v1752 = vand.u32 %v1697, %v1750
        %1754 = vmatprep.subr.bf16.mxu0 0
        %1755 = vmatpush1.bf16.msra.mxu0 %v1696
        %1756 = vmatprep.subr.bf16.mxu0 0
        %1757 = vmatpush1.bf16.msra.mxu0 %v1752
        %1758 = vmatprep.subr.bf16.mxu0 0
        %1759 = vmatpush1.bf16.msra.mxu0 0
        %1760 = vmatprep.subr.bf16.mxu0 0
        %1761 = vmatpush1.bf16.msra.mxu0 0
        %1762 = vmatprep.subr.bf16.mxu0 0
        %1763 = vmatpush1.bf16.msra.mxu0 0
        %1764 = vmatprep.subr.bf16.mxu0 0
        %1765 = vmatpush1.bf16.msra.mxu0 0
        %1766 = vmatprep.subr.bf16.mxu0 0
        %1767 = vmatpush1.bf16.msra.mxu0 0
        %1768 = vmatprep.subr.bf16.mxu0 0
        %1769 = vmatpush1.bf16.msra.mxu0 0
        %1770 = vmatprep.subr.bf16.mxu0 0
        %1771 = vmatpush1.bf16.msra.mxu0 0
        %1772 = vmatprep.subr.bf16.mxu0 0
        %1773 = vmatpush1.bf16.msra.mxu0 0
        %1774 = vmatprep.subr.bf16.mxu0 0
        %1775 = vmatpush1.bf16.msra.mxu0 0
        %1776 = vmatprep.subr.bf16.mxu0 0
        %1777 = vmatpush1.bf16.msra.mxu0 0
        %1778 = vmatprep.subr.bf16.mxu0 0
        %1779 = vmatpush1.bf16.msra.mxu0 0
        %1780 = vmatprep.subr.bf16.mxu0 0
        %1781 = vmatpush1.bf16.msra.mxu0 0
        %1782 = vmatprep.subr.bf16.mxu0 0
        %1783 = vmatpush1.bf16.msra.mxu0 0
        %1784 = vmatprep.subr.bf16.mxu0 0
        %1785 = vmatpush1.bf16.msra.mxu0 0
        %1786 = vmatprep.mubr.bf16.mxu0 0
        %1787 = vmatmul.mubr.bf16.gmra.mrb[0].mxu0 %v1701
        %v1788 = vpop.f32.mrb[0].mxu0
        %v1789 = vadd.f32 %v1686, %v1788
        %v1790 = vpop.f32.mrb[0].mxu0
        %v1791 = vpop.f32.mrb[0].mxu0
        %v1792 = vadd.f32 %v1686, %v1791
        %v1793 = vpop.f32.mrb[0].mxu0
        %1794 = vmatprep.mubr.bf16.mxu0 0
        %1795 = vmatmul.mubr.bf16.gmra.mrb[0].mxu0 %v1704
        %v1796 = vpop.f32.mrb[0].mxu0
        %v1797 = vadd.f32 %v1686, %v1796
        %v1798 = vpop.f32.mrb[0].mxu0
        %v1799 = vpop.f32.mrb[0].mxu0
        %v1800 = vadd.f32 %v1686, %v1799
        %v1801 = vpop.f32.mrb[0].mxu0
        %1802 = vmatprep.mubr.bf16.mxu0 0
        %1803 = vmatmul.mubr.bf16.gmra.mrb[0].mxu0 %v1707
        %v1804 = vpop.f32.mrb[0].mxu0
        %v1805 = vadd.f32 %v1686, %v1804
        %v1806 = vpop.f32.mrb[0].mxu0
        %v1807 = vpop.f32.mrb[0].mxu0
        %v1808 = vadd.f32 %v1686, %v1807
        %v1809 = vpop.f32.mrb[0].mxu0
        %1810 = vmatprep.mubr.bf16.mxu0 0
        %1811 = vmatmul.mubr.bf16.gmra.mrb[0].mxu0 %v1710
        %v1812 = vpop.f32.mrb[0].mxu0
        %v1813 = vadd.f32 %v1686, %v1812
        %v1814 = vpop.f32.mrb[0].mxu0
        %v1815 = vpop.f32.mrb[0].mxu0
        %v1816 = vadd.f32 %v1686, %v1815
        %v1817 = vpop.f32.mrb[0].mxu0
        %1818 = vmatprep.mubr.bf16.mxu0 0
        %1819 = vmatmul.mubr.bf16.gmra.mrb[0].mxu0 %v1713
        %v1820 = vpop.f32.mrb[0].mxu0
        %v1821 = vadd.f32 %v1686, %v1820
        %v1822 = vpop.f32.mrb[0].mxu0
        %v1823 = vpop.f32.mrb[0].mxu0
        %v1824 = vadd.f32 %v1686, %v1823
        %v1825 = vpop.f32.mrb[0].mxu0
        %1826 = vmatprep.mubr.bf16.mxu0 0
        %1827 = vmatmul.mubr.bf16.gmra.mrb[0].mxu0 %v1716
        %v1828 = vpop.f32.mrb[0].mxu0
        %v1829 = vadd.f32 %v1686, %v1828
        %v1830 = vpop.f32.mrb[0].mxu0
        %v1831 = vpop.f32.mrb[0].mxu0
        %v1832 = vadd.f32 %v1686, %v1831
        %v1833 = vpop.f32.mrb[0].mxu0
        %1834 = vmatprep.mubr.bf16.mxu0 0
        %1835 = vmatmul.mubr.bf16.gmra.mrb[0].mxu0 %v1719
        %v1836 = vpop.f32.mrb[0].mxu0
        %v1837 = vadd.f32 %v1686, %v1836
        %v1838 = vpop.f32.mrb[0].mxu0
        %v1839 = vpop.f32.mrb[0].mxu0
        %v1840 = vadd.f32 %v1686, %v1839
        %v1841 = vpop.f32.mrb[0].mxu0
        %1842 = vmatprep.mubr.bf16.mxu0 0
        %1843 = vmatmul.mubr.bf16.gmra.mrb[0].mxu0 %v1722
        %v1844 = vpop.f32.mrb[0].mxu0
        %v1845 = vadd.f32 %v1686, %v1844
        %v1846 = vpop.f32.mrb[0].mxu0
        %v1847 = vpop.f32.mrb[0].mxu0
        %v1848 = vadd.f32 %v1686, %v1847
        %v1849 = vpop.f32.mrb[0].mxu0
        %1850 = vmatprep.mubr.bf16.mxu0 0
        %1851 = vmatmul.mubr.bf16.gmra.mrb[0].mxu0 %v1725
        %v1852 = vpop.f32.mrb[0].mxu0
        %v1853 = vadd.f32 %v1686, %v1852
        %v1854 = vpop.f32.mrb[0].mxu0
        %v1855 = vpop.f32.mrb[0].mxu0
        %v1856 = vadd.f32 %v1686, %v1855
        %v1857 = vpop.f32.mrb[0].mxu0
        %1858 = vmatprep.mubr.bf16.mxu0 0
        %1859 = vmatmul.mubr.bf16.gmra.mrb[0].mxu0 %v1728
        %v1860 = vpop.f32.mrb[0].mxu0
        %v1861 = vadd.f32 %v1686, %v1860
        %v1862 = vpop.f32.mrb[0].mxu0
        %v1863 = vpop.f32.mrb[0].mxu0
        %v1864 = vadd.f32 %v1686, %v1863
        %v1865 = vpop.f32.mrb[0].mxu0
        %1866 = vmatprep.mubr.bf16.mxu0 0
        %1867 = vmatmul.mubr.bf16.gmra.mrb[0].mxu0 %v1731
        %v1868 = vpop.f32.mrb[0].mxu0
        %v1869 = vadd.f32 %v1686, %v1868
        %v1870 = vpop.f32.mrb[0].mxu0
        %v1871 = vpop.f32.mrb[0].mxu0
        %v1872 = vadd.f32 %v1686, %v1871
        %v1873 = vpop.f32.mrb[0].mxu0
        %1874 = vmatprep.mubr.bf16.mxu0 0
        %1875 = vmatmul.mubr.bf16.gmra.mrb[0].mxu0 %v1734
        %v1876 = vpop.f32.mrb[0].mxu0
        %v1877 = vadd.f32 %v1686, %v1876
        %v1878 = vpop.f32.mrb[0].mxu0
        %v1879 = vpop.f32.mrb[0].mxu0
        %v1880 = vadd.f32 %v1686, %v1879
        %v1881 = vpop.f32.mrb[0].mxu0
        %1882 = vmatprep.mubr.bf16.mxu0 0
        %1883 = vmatmul.mubr.bf16.gmra.mrb[0].mxu0 %v1737
        %v1884 = vpop.f32.mrb[0].mxu0
        %v1885 = vadd.f32 %v1686, %v1884
        %v1886 = vpop.f32.mrb[0].mxu0
        %v1887 = vpop.f32.mrb[0].mxu0
        %v1888 = vadd.f32 %v1686, %v1887
        %v1889 = vpop.f32.mrb[0].mxu0
        %1890 = vmatprep.mubr.bf16.mxu0 0
        %1891 = vmatmul.mubr.bf16.gmra.mrb[0].mxu0 %v1740
        %v1892 = vpop.f32.mrb[0].mxu0
        %v1893 = vadd.f32 %v1686, %v1892
        %v1894 = vpop.f32.mrb[0].mxu0
        %v1895 = vpop.f32.mrb[0].mxu0
        %v1896 = vadd.f32 %v1686, %v1895
        %v1897 = vpop.f32.mrb[0].mxu0
        %1898 = vmatprep.mubr.bf16.mxu0 0
        %1899 = vmatmul.mubr.bf16.gmra.mrb[0].mxu0 %v1743
        %v1900 = vpop.f32.mrb[0].mxu0
        %v1901 = vadd.f32 %v1686, %v1900
        %v1902 = vpop.f32.mrb[0].mxu0
        %v1903 = vpop.f32.mrb[0].mxu0
        %v1904 = vadd.f32 %v1686, %v1903
        %v1905 = vpop.f32.mrb[0].mxu0
        %1906 = vmatprep.mubr.bf16.mxu0 0
        %1907 = vmatmul.mubr.bf16.gmra.mrb[0].mxu0 %v1746
        %v1908 = vpop.f32.mrb[0].mxu0
        %v1909 = vadd.f32 %v1686, %v1908
        %v1910 = vpop.f32.mrb[0].mxu0
        %v1911 = vpop.f32.mrb[0].mxu0
        %v1912 = vadd.f32 %v1686, %v1911
        %v1913 = vpop.f32.mrb[0].mxu0
        %1914 = vdwg.mxu0
        %v1915 = vmax.f32 %v1789, 0.0
        %v1916 = vmax.f32 %v1792, 0.0
        %v1917 = vmax.f32 %v1797, 0.0
        %v1918 = vmax.f32 %v1800, 0.0
        %v1919 = vmax.f32 %v1805, 0.0
        %v1920 = vmax.f32 %v1808, 0.0
        %v1921 = vmax.f32 %v1813, 0.0
        %v1922 = vmax.f32 %v1816, 0.0
        %v1923 = vmax.f32 %v1821, 0.0
        %v1924 = vmax.f32 %v1824, 0.0
        %v1925 = vmax.f32 %v1829, 0.0
        %v1926 = vmax.f32 %v1832, 0.0
        %v1927 = vmax.f32 %v1837, 0.0
        %v1928 = vmax.f32 %v1840, 0.0
        %v1929 = vmax.f32 %v1845, 0.0
        %v1930 = vmax.f32 %v1848, 0.0
        %v1931 = vmax.f32 %v1853, 0.0
        %v1932 = vmax.f32 %v1856, 0.0
        %v1933 = vmax.f32 %v1861, 0.0
        %v1934 = vmax.f32 %v1864, 0.0
        %v1935 = vmax.f32 %v1869, 0.0
        %v1936 = vmax.f32 %v1872, 0.0
        %v1937 = vmax.f32 %v1877, 0.0
        %v1938 = vmax.f32 %v1880, 0.0
        %v1939 = vmax.f32 %v1885, 0.0
        %v1940 = vmax.f32 %v1888, 0.0
        %v1941 = vmax.f32 %v1893, 0.0
        %v1942 = vmax.f32 %v1896, 0.0
        %v1943 = vmax.f32 %v1901, 0.0
        %v1944 = vmax.f32 %v1904, 0.0
        %v1945 = vmax.f32 %v1909, 0.0
        %v1946 = vmax.f32 %v1912, 0.0
        %v1947 = vpack.c.bf16 %v1916, %v1915
        %v1948 = vpack.c.bf16 %v1918, %v1917
        %v1949 = vpack.c.bf16 %v1920, %v1919
        %v1950 = vpack.c.bf16 %v1922, %v1921
        %v1951 = vpack.c.bf16 %v1924, %v1923
        %v1952 = vpack.c.bf16 %v1926, %v1925
        %v1953 = vpack.c.bf16 %v1928, %v1927
        %v1954 = vpack.c.bf16 %v1930, %v1929
        %v1955 = vpack.c.bf16 %v1932, %v1931
        %v1956 = vpack.c.bf16 %v1934, %v1933
        %v1957 = vpack.c.bf16 %v1936, %v1935
        %v1958 = vpack.c.bf16 %v1938, %v1937
        %v1959 = vpack.c.bf16 %v1940, %v1939
        %v1960 = vpack.c.bf16 %v1942, %v1941
        %v1961 = vpack.c.bf16 %v1944, %v1943
        %v1962 = vpack.c.bf16 %v1946, %v1945
        %v1963 = vld [vmem:[%s3] sm:$0x3]
        %v1964 = vld [vmem:[%s4] sm:$0xf]
        %1966 = vset.pattern.permute.xlu0 0
        %1967 = vperm.xlu0 %1966, %v1964
        %v1968 = vpop.permute.xlu0 %1967
        %vm1970 = vcmask 261120
        %v1972 = vsel %vm1970, %v1963, 0
        %v1975 = vsel %vm1970, %v1947, 0
        %v1978 = vsel %vm1970, %v1948, 0
        %v1981 = vsel %vm1970, %v1949, 0
        %v1984 = vsel %vm1970, %v1950, 0
        %v1987 = vsel %vm1970, %v1951, 0
        %v1990 = vsel %vm1970, %v1952, 0
        %v1993 = vsel %vm1970, %v1953, 0
        %v1996 = vsel %vm1970, %v1954, 0
        %v1999 = vsel %vm1970, %v1955, 0
        %v2002 = vsel %vm1970, %v1956, 0
        %v2005 = vsel %vm1970, %v1957, 0
        %v2008 = vsel %vm1970, %v1958, 0
        %v2011 = vsel %vm1970, %v1959, 0
        %v2014 = vsel %vm1970, %v1960, 0
        %v2017 = vsel %vm1970, %v1961, 0
        %v2020 = vsel %vm1970, %v1962, 0
        %2022 = vmatprep.subr.bf16.mxu0 0
        %2023 = vmatpush1.bf16.xpose.msra.mxu0 %v1975
        %2024 = vmatprep.subr.bf16.mxu0 0
        %2025 = vmatpush1.bf16.xpose.msra.mxu0 %v1978
        %2026 = vmatprep.subr.bf16.mxu0 0
        %2027 = vmatpush1.bf16.xpose.msra.mxu0 %v1981
        %2028 = vmatprep.subr.bf16.mxu0 0
        %2029 = vmatpush1.bf16.xpose.msra.mxu0 %v1984
        %2030 = vmatprep.subr.bf16.mxu0 0
        %2031 = vmatpush1.bf16.xpose.msra.mxu0 %v1987
        %2032 = vmatprep.subr.bf16.mxu0 0
        %2033 = vmatpush1.bf16.xpose.msra.mxu0 %v1990
        %2034 = vmatprep.subr.bf16.mxu0 0
        %2035 = vmatpush1.bf16.xpose.msra.mxu0 %v1993
        %2036 = vmatprep.subr.bf16.mxu0 0
        %2037 = vmatpush1.bf16.xpose.msra.mxu0 %v1996
        %2038 = vmatprep.subr.bf16.mxu0 0
        %2039 = vmatpush1.bf16.xpose.msra.mxu0 %v1999
        %2040 = vmatprep.subr.bf16.mxu0 0
        %2041 = vmatpush1.bf16.xpose.msra.mxu0 %v2002
        %2042 = vmatprep.subr.bf16.mxu0 0
        %2043 = vmatpush1.bf16.xpose.msra.mxu0 %v2005
        %2044 = vmatprep.subr.bf16.mxu0 0
        %2045 = vmatpush1.bf16.xpose.msra.mxu0 %v2008
        %2046 = vmatprep.subr.bf16.mxu0 0
        %2047 = vmatpush1.bf16.xpose.msra.mxu0 %v2011
        %2048 = vmatprep.subr.bf16.mxu0 0
        %2049 = vmatpush1.bf16.xpose.msra.mxu0 %v2014
        %2050 = vmatprep.subr.bf16.mxu0 0
        %2051 = vmatpush1.bf16.xpose.msra.mxu0 %v2017
        %2052 = vmatprep.subr.bf16.mxu0 0
        %2053 = vmatpush1.bf16.xpose.msra.mxu0 %v2020
        %2054 = vmatprep.mubr.bf16.mxu0 0
        %2055 = vmatmul.mubr.bf16.gmra.mrb[0].mxu0 %v1972
        %v2056 = vpop.f32.mrb[0].mxu0
        %v2057 = vadd.f32 %v1968, %v2056
        %v2058 = vpop.f32.mrb[0].mxu0
        %v2059 = vadd.f32 %v1968, %v2058
        %v2060 = vpop.f32.mrb[0].mxu0
        %v2061 = vpop.f32.mrb[0].mxu0
        %2062 = vdwg.mxu0
        %v2065 = vcombine.low %v2057, %v2059
        %2067 = vst [vmem:[%s217] sm:$0xff] %v2065
        %s2068 = sand.u32 %s137, 1
        %s2069 = scalar_lea.sflag [#allocation3], %s2068
        %s2070 = sand.u32 %s137, 1
        %s2071 = smul.addr %s2070, 8
        %s2072 = scalar_lea.vmem [#allocation2], %s2071
        // Predicated region
        $region41: #{tpu_custom_call.1} parent=39 // pred_check
          %p2073 = pneg %p147
        $region42: #{tpu_custom_call.1} parent=39 // pred_check_branch
          %2075 = sbr.rel (%p2073) target = $region44
        $region43: #{tpu_custom_call.1} parent=39 // pred_region
          %s2077 = ssub.s32 128, 128
          %2078 = vsyncadd %s2069, %s2077
          %s2079 = smul.addr %s19, 2
          %s2080 = smul.addr %s2079, 64
          %s2081 = scalar_lea.hbm %s5, %s2080
          %s2083 = sshll.u32 %s2072, 4
          %s2084 = int_to_ptr.vmem [resolvable:$true] %s2083
          %2086 = dma.vmem_to_hbm [thread:$0]  %s2084, 128, %s2081, %s2069
        $region44: #{tpu_custom_call.1} parent=39 // pred_fallthru
          _
      $region40: #{tpu_custom_call.1} parent=5 // pred_fallthru
        _
      %p2087 = scmp.le.s32.totalorder 2, %s14
      // Predicated region
      $region45: #{tpu_custom_call.1} parent=5 // pred_check
        %p2088 = pneg %p2087
      $region46: #{tpu_custom_call.1} parent=5 // pred_check_branch
        %2090 = sbr.rel (%p2088) target = $region48
      $region47: #{tpu_custom_call.1} parent=5 // pred_region
        %s2091 = ssub.s32 %s14, 2
        // Predicated region
        $region49: #{tpu_custom_call.1} parent=47 // pred_check
          %p2092 = pneg %p153
        $region50: #{tpu_custom_call.1} parent=47 // pred_check_branch
          %2094 = sbr.rel (%p2092) target = $region52
        $region51: #{tpu_custom_call.1} parent=47 // pred_region
          %s2095 = sand.u32 %s138, 1
          %s2096 = scalar_lea.sflag [#allocation3], %s2095
          %s2097 = sand.u32 %s138, 1
          %s2098 = smul.addr %s2097, 8
          %s2099 = scalar_lea.vmem [#allocation2], %s2098
          %2100 = dma.done %s2096, 128
        $region52: #{tpu_custom_call.1} parent=47 // pred_fallthru
          _
      $region48: #{tpu_custom_call.1} parent=5 // pred_fallthru
        _
    $region6: #{tpu_custom_call.1} parent=1 // loop_footer
      %s18 = sadd.s32 1, %s14
    $region7: #{tpu_custom_call.1} parent=1 // loop_footer_branch
      %13 = sbr.rel target = $region3
    $region8: #{tpu_custom_call.1} parent=1 // loop_exit
      _
    %2101 = vsyncpa [#allocation3], 1
    %s2102 = scalar_lea.sflag [#allocation3], 1
    %2103 = vsyncpa %s2102, 1

</llo_original>
